<compile_context>
chip_gen: v5e
topology: v5e:2x2
jax: 0.10.0
libtpu: 0.0.40
codegen_flags: <defaults>
</compile_context>

<pallas_src>
import math

import jax
import jax.numpy as jnp
from jax.experimental import pallas as pl
from jax.experimental.pallas import tpu as pltpu

_LANE = 128
_SUBLANE = 8


def _round_up(n, m):
    return ((n + m - 1) // m) * m


def _pad_to(a, shape):
    pads = tuple((0, t - s) for s, t in zip(a.shape, shape))
    if all(p == (0, 0) for p in pads):
        return a
    return jnp.pad(a, pads)


def _crop(a, rows, cols):
    if a.shape[0] == rows and a.shape[1] == cols:
        return a
    return a[:rows, :cols]


def _zero_map(ndim):
    zeros = (0,) * ndim
    return lambda i, _z=zeros: _z


def _spec(shape, index_map, buffers):
    """BlockSpec with an explicit buffer-count hint; falls back if unsupported."""
    if buffers is not None and buffers != 2:
        try:
            return pl.BlockSpec(shape, index_map,
                                pipeline_mode=pl.Buffered(buffers))
        except TypeError:
            pass
    return pl.BlockSpec(shape, index_map)


# -----------------------------------------------------------------------------
# Pallas kernel: whole forward pass (conv0 + encoder MLP + decoder MLP)
# -----------------------------------------------------------------------------
def _make_ae_kernel(store_intermediates):
    def ae_kernel(x_ref, w0_ref, b0_ref,
                  we1_ref, be1_ref, we2_ref, be2_ref, we3_ref, be3_ref,
                  wz_ref, bz_ref,
                  wd1_ref, bd1_ref, wd2_ref, bd2_ref, wd3_ref, bd3_ref,
                  wxb_ref, bxb_ref, *out_refs):
        if store_intermediates:
            xbar_ref, h1_ref, h2_ref, h3_ref, z_ref, prox_ref = out_refs
        else:
            (xbar_ref,) = out_refs

        # Conv1d(in=V, out=1, kernel_size=1) + squeeze(1): weighted sum over
        # channels.  x tile is (TB, V, Lp); conv weight/bias are SMEM scalars.
        # Two partial accumulators break the serial add chain (v5e co-issue).
        # Note: padded lane columns of `pro` hold b0 (the wrapper crops them).
        x = x_ref[...]
        num_v = x.shape[1]
        acc0 = x[:, 0, :] * w0_ref[0, 0]
        acc1 = None
        for v in range(1, num_v):
            term = x[:, v, :] * w0_ref[0, v]
            if v % 2 == 1:
                acc1 = term if acc1 is None else acc1 + term
            else:
                acc0 = acc0 + term
        pro = acc0 if acc1 is None else acc0 + acc1
        pro = pro + b0_ref[0, 0]
        if store_intermediates:
            prox_ref[...] = pro

        def lin(h, w_ref, b_ref):
            w = w_ref[...]
            # bf16 weights: cast the activation at the dot input only;
            # accumulate in f32 on the MXU; bias add stays f32.
            return jnp.dot(h.astype(w.dtype), w,
                           preferred_element_type=jnp.float32) + b_ref[...]

        # Encoder -- store each intermediate immediately (short live ranges).
        h1 = jnp.maximum(lin(pro, we1_ref, be1_ref), 0.0)
        if store_intermediates:
            h1_ref[...] = h1
        h2 = jnp.maximum(lin(h1, we2_ref, be2_ref), 0.0)
        if store_intermediates:
            h2_ref[...] = h2
        h3 = jnp.maximum(lin(h2, we3_ref, be3_ref), 0.0)
        if store_intermediates:
            h3_ref[...] = h3
        # Dropout(0.5): inference semantics -> identity.
        z = lin(h3, wz_ref, bz_ref)
        if store_intermediates:
            z_ref[...] = z

        # Decoder.
        d1 = jnp.maximum(lin(z, wd1_ref, bd1_ref), 0.0)
        d2 = jnp.maximum(lin(d1, wd2_ref, bd2_ref), 0.0)
        d3 = jnp.maximum(lin(d2, wd3_ref, bd3_ref), 0.0)
        # Dropout(0.5): inference semantics -> identity.
        xbar_ref[...] = lin(d3, wxb_ref, bxb_ref)

    return ae_kernel


# -----------------------------------------------------------------------------
# One-time parameter preparation (padding + optional bf16 cast), hoisted out of
# the per-call path.
# -----------------------------------------------------------------------------
def prepare_params(params, compute_dtype=jnp.float32):
    (w0, b0, we1, be1, we2, be2, we3, be3, wz, bz,
     wd1, bd1, wd2, bd2, wd3, bd3, wxb, bxb) = params

    V = w0.shape[1]
    L = we1.shape[0]
    d_e1, d_e2, d_e3 = we1.shape[1], we2.shape[1], we3.shape[1]
    d_z = wz.shape[1]
    d_d1, d_d2, d_d3 = wd1.shape[1], wd2.shape[1], wd3.shape[1]
    assert wxb.shape[1] == L

    Lp = _round_up(L, _LANE)
    e1p, e2p, e3p = (_round_up(d, _LANE) for d in (d_e1, d_e2, d_e3))
    zp = _round_up(d_z, _LANE)
    d1p, d2p, d3p = (_round_up(d, _LANE) for d in (d_d1, d_d2, d_d3))

    wdt = compute_dtype

    def wpad(w, r, c):
        return _pad_to(w, (r, c)).astype(wdt)

    def bpad(bv, c):
        return _pad_to(bv, (1, c)).astype(jnp.float32)

    tensors = (
        w0.astype(jnp.float32), b0.astype(jnp.float32),   # conv -> SMEM scalars
        wpad(we1, Lp, e1p), bpad(be1, e1p),
        wpad(we2, e1p, e2p), bpad(be2, e2p),
        wpad(we3, e2p, e3p), bpad(be3, e3p),
        wpad(wz, e3p, zp), bpad(bz, zp),
        wpad(wd1, zp, d1p), bpad(bd1, d1p),
        wpad(wd2, d1p, d2p), bpad(bd2, d2p),
        wpad(wd3, d2p, d3p), bpad(bd3, d3p),
        wpad(wxb, d3p, Lp), bpad(bxb, Lp),
    )
    return {
        "tensors": tensors,
        "variable_num": V,
        "dims": (L, d_e1, d_e2, d_e3, d_z),
        "padded": (Lp, e1p, e2p, e3p, zp),
    }


# -----------------------------------------------------------------------------
# Wrapper: batch tiling, BlockSpecs, pallas_call
# -----------------------------------------------------------------------------
def ae_forward(x, prepared, *, batch_tile=None, return_intermediates=True,
               weight_buffers=1, x_buffers=None, vmem_limit_bytes=48 << 20):
    """x: (B, variable_num, n_input) float32; prepared = prepare_params(...).

    Returns (x_bar, enc_h1, enc_h2, enc_h3, z, pro_x) matching the PyTorch
    module's forward(), or just x_bar when return_intermediates=False.
    """
    B, V, L = x.shape
    assert V == prepared["variable_num"] and L == prepared["dims"][0]
    _, d_e1, d_e2, d_e3, d_z = prepared["dims"]
    Lp, e1p, e2p, e3p, zp = prepared["padded"]
    tensors = prepared["tensors"]

    # Batch tile: multiple of the f32 sublane width; ensure >=2 grid steps
    # when the batch allows it (so both v7x TensorCores get work).
    if batch_tile is None:
        if B <= 2 * _SUBLANE:
            TB = _round_up(max(B, 1), _SUBLANE)
        else:
            TB = min(256, _round_up((B + 1) // 2, _SUBLANE))
    else:
        TB = _round_up(batch_tile, _SUBLANE)
    Bp = _round_up(B, TB)
    grid = (Bp // TB,)

    if x.dtype != jnp.float32:
        x = x.astype(jnp.float32)
    x_p = _pad_to(x, (Bp, V, Lp))   # no transpose; pad only if needed

    kernel = _make_ae_kernel(return_intermediates)
    smem = pl.BlockSpec(memory_space=pltpu.MemorySpace.SMEM)

    def _in_specs(use_hints):
        wb = weight_buffers if use_hints else None
        xb = x_buffers if use_hints else None
        specs = [
            _spec((TB, V, Lp), lambda i: (i, 0, 0), xb),   # x, batch-tiled
            smem,                                          # conv weight (1, V)
            smem,                                          # conv bias (1, 1)
        ]
        for t in tensors[2:]:                              # resident W / b
            specs.append(_spec(t.shape, _zero_map(t.ndim), wb))
        return specs

    if return_intermediates:
        out_dims = (Lp, e1p, e2p, e3p, zp, Lp)   # x_bar, h1, h2, h3, z, pro_x
    else:
        out_dims = (Lp,)                          # x_bar only
    out_shape = tuple(jax.ShapeDtypeStruct((Bp, d), jnp.float32)
                      for d in out_dims)
    out_specs = tuple(pl.BlockSpec((TB, d), lambda i: (i, 0))
                      for d in out_dims)

    inputs = (x_p,) + tensors

    def _run(use_hints):
        return pl.pallas_call(
            kernel,
            grid=grid,
            out_shape=out_shape,
            in_specs=_in_specs(use_hints),
            out_specs=out_specs,
            compiler_params=pltpu.CompilerParams(
                dimension_semantics=("parallel",),
                vmem_limit_bytes=vmem_limit_bytes),
        )(*inputs)

    wants_hints = (weight_buffers not in (None, 2)) or (x_buffers not in (None, 2))
    if wants_hints:
        try:
            outs = _run(True)
        except Exception:
            # pipeline_mode buffer hints not supported by this jax/Mosaic
            # build -> fall back to default double buffering.
            outs = _run(False)
    else:
        outs = _run(False)

    if return_intermediates:
        x_bar, h1, h2, h3, z, pro = outs
        return (_crop(x_bar, B, L), _crop(h1, B, d_e1), _crop(h2, B, d_e2),
                _crop(h3, B, d_e3), _crop(z, B, d_z), _crop(pro, B, L))
    (x_bar,) = outs
    return _crop(x_bar, B, L)


# -----------------------------------------------------------------------------
# Deterministic parameter init (mimics PyTorch Linear/Conv1d uniform init).
# Linear weights are stored pre-transposed as (in_features, out_features).
# -----------------------------------------------------------------------------
def init_params(key, variable_num, n_input, n_enc_1, n_enc_2, n_enc_3,
                n_z, n_dec_1, n_dec_2, n_dec_3):
    def lin_init(key, n_in, n_out):
        k1, k2 = jax.random.split(key)
        bound = 1.0 / math.sqrt(n_in)
        w = jax.random.uniform(k1, (n_in, n_out), jnp.float32, -bound, bound)
        b = jax.random.uniform(k2, (1, n_out), jnp.float32, -bound, bound)
        return w, b

    keys = jax.random.split(key, 10)
    cbound = 1.0 / math.sqrt(variable_num)
    w0 = jax.random.uniform(keys[0], (1, variable_num), jnp.float32, -cbound, cbound)
    b0 = jax.random.uniform(keys[1], (1, 1), jnp.float32, -cbound, cbound)

    we1, be1 = lin_init(keys[2], n_input, n_enc_1)
    we2, be2 = lin_init(keys[3], n_enc_1, n_enc_2)
    we3, be3 = lin_init(keys[4], n_enc_2, n_enc_3)
    wz, bz = lin_init(keys[5], n_enc_3, n_z)
    wd1, bd1 = lin_init(keys[6], n_z, n_dec_1)
    wd2, bd2 = lin_init(keys[7], n_dec_1, n_dec_2)
    wd3, bd3 = lin_init(keys[8], n_dec_2, n_dec_3)
    wxb, bxb = lin_init(keys[9], n_dec_3, n_input)

    return (w0, b0, we1, be1, we2, be2, we3, be3, wz, bz,
            wd1, bd1, wd2, bd2, wd3, bd3, wxb, bxb)


# -----------------------------------------------------------------------------
# Pure-JAX reference (for correctness check)
# -----------------------------------------------------------------------------
def ae_forward_ref(x, params):
    (w0, b0, we1, be1, we2, be2, we3, be3, wz, bz,
     wd1, bd1, wd2, bd2, wd3, bd3, wxb, bxb) = params
    pro = jnp.einsum("bvl,v->bl", x, w0[0]) + b0[0, 0]
    h1 = jax.nn.relu(pro @ we1 + be1)
    h2 = jax.nn.relu(h1 @ we2 + be2)
    h3 = jax.nn.relu(h2 @ we3 + be3)
    z = h3 @ wz + bz
    d1 = jax.nn.relu(z @ wd1 + bd1)
    d2 = jax.nn.relu(d1 @ wd2 + bd2)
    d3 = jax.nn.relu(d2 @ wd3 + bd3)
    x_bar = d3 @ wxb + bxb
    return x_bar, h1, h2, h3, z, pro


if __name__ == "__main__":
    # Small, forward-consistent shapes.
    B = 2
    variable_num = 4
    n_input = 16
    n_enc_1, n_enc_2, n_enc_3 = 32, 32, 32
    n_dec_1, n_dec_2, n_dec_3 = 32, 32, 32
    n_z = 8

    key = jax.random.PRNGKey(0)
    kx, kp = jax.random.split(key)
    x = jax.random.normal(kx, (B, variable_num, n_input), dtype=jnp.float32)
    params = init_params(kp, variable_num, n_input, n_enc_1, n_enc_2, n_enc_3,
                         n_z, n_dec_1, n_dec_2, n_dec_3)

    refs = ae_forward_ref(x, params)

    # f32 path: exact check vs reference.  (Params prepared once, outside the
    # per-call path.)
    prep_f32 = prepare_params(params)
    outs = jax.block_until_ready(ae_forward(x, prep_f32))
    for o, r in zip(outs, refs):
        assert o.shape == r.shape and o.dtype == r.dtype
        assert jnp.allclose(o, r, atol=1e-5, rtol=1e-5), "f32 mismatch vs reference"

    # bf16 weights / f32 MXU accumulation (valid on v5e/v6e/v7x).
    prep_bf16 = prepare_params(params, compute_dtype=jnp.bfloat16)
    outs_bf16 = jax.block_until_ready(ae_forward(x, prep_bf16))
    for o, r in zip(outs_bf16, refs):
        assert o.shape == r.shape
        assert jnp.allclose(o, r, atol=1e-1, rtol=1e-1), "bf16 mismatch vs reference"

    # x_bar-only mode (skips intermediate output stores).
    xb_only = jax.block_until_ready(
        ae_forward(x, prep_f32, return_intermediates=False))
    assert jnp.allclose(xb_only, refs[0], atol=1e-5, rtol=1e-5), "x_bar-only mismatch"

    print("KERNEL_OK")
</pallas_src>

<mosaic_0001>
module attributes {stable_mosaic.version = 11 : i64} {
  func.func @ae_kernel(%arg0: i32, %arg1: memref<8x4x128xf32, #tpu.memory_space<vmem>>, %arg2: memref<1x4xf32, #tpu.memory_space<smem>>, %arg3: memref<1x1xf32, #tpu.memory_space<smem>>, %arg4: memref<128x128xf32, #tpu.memory_space<vmem>>, %arg5: memref<1x128xf32, #tpu.memory_space<vmem>>, %arg6: memref<128x128xf32, #tpu.memory_space<vmem>>, %arg7: memref<1x128xf32, #tpu.memory_space<vmem>>, %arg8: memref<128x128xf32, #tpu.memory_space<vmem>>, %arg9: memref<1x128xf32, #tpu.memory_space<vmem>>, %arg10: memref<128x128xf32, #tpu.memory_space<vmem>>, %arg11: memref<1x128xf32, #tpu.memory_space<vmem>>, %arg12: memref<128x128xf32, #tpu.memory_space<vmem>>, %arg13: memref<1x128xf32, #tpu.memory_space<vmem>>, %arg14: memref<128x128xf32, #tpu.memory_space<vmem>>, %arg15: memref<1x128xf32, #tpu.memory_space<vmem>>, %arg16: memref<128x128xf32, #tpu.memory_space<vmem>>, %arg17: memref<1x128xf32, #tpu.memory_space<vmem>>, %arg18: memref<128x128xf32, #tpu.memory_space<vmem>>, %arg19: memref<1x128xf32, #tpu.memory_space<vmem>>, %arg20: memref<8x128xf32, #tpu.memory_space<vmem>>, %arg21: memref<8x128xf32, #tpu.memory_space<vmem>>, %arg22: memref<8x128xf32, #tpu.memory_space<vmem>>, %arg23: memref<8x128xf32, #tpu.memory_space<vmem>>, %arg24: memref<8x128xf32, #tpu.memory_space<vmem>>, %arg25: memref<8x128xf32, #tpu.memory_space<vmem>>) attributes {dimension_semantics = [#tpu.dimension_semantics<parallel>], iteration_bounds = array<i64: 1>, scalar_prefetch = 0 : i64, scratch_operands = 0 : i64, tpu.core_type = #tpu.core_type<tc>, window_params = [{transform_indices = @transform_0, window_bounds = array<i64: 8, 4, 128>}, {transform_indices = @transform_1, window_bounds = array<i64: 1, 4>}, {transform_indices = @transform_2, window_bounds = array<i64: 1, 1>}, {pipeline_mode = #tpu.pipeline_mode<synchronous>, transform_indices = @transform_3, window_bounds = array<i64: 128, 128>}, {pipeline_mode = #tpu.pipeline_mode<synchronous>, transform_indices = @transform_4, window_bounds = array<i64: 1, 128>}, {pipeline_mode = #tpu.pipeline_mode<synchronous>, transform_indices = @transform_5, window_bounds = array<i64: 128, 128>}, {pipeline_mode = #tpu.pipeline_mode<synchronous>, transform_indices = @transform_6, window_bounds = array<i64: 1, 128>}, {pipeline_mode = #tpu.pipeline_mode<synchronous>, transform_indices = @transform_7, window_bounds = array<i64: 128, 128>}, {pipeline_mode = #tpu.pipeline_mode<synchronous>, transform_indices = @transform_8, window_bounds = array<i64: 1, 128>}, {pipeline_mode = #tpu.pipeline_mode<synchronous>, transform_indices = @transform_9, window_bounds = array<i64: 128, 128>}, {pipeline_mode = #tpu.pipeline_mode<synchronous>, transform_indices = @transform_10, window_bounds = array<i64: 1, 128>}, {pipeline_mode = #tpu.pipeline_mode<synchronous>, transform_indices = @transform_11, window_bounds = array<i64: 128, 128>}, {pipeline_mode = #tpu.pipeline_mode<synchronous>, transform_indices = @transform_12, window_bounds = array<i64: 1, 128>}, {pipeline_mode = #tpu.pipeline_mode<synchronous>, transform_indices = @transform_13, window_bounds = array<i64: 128, 128>}, {pipeline_mode = #tpu.pipeline_mode<synchronous>, transform_indices = @transform_14, window_bounds = array<i64: 1, 128>}, {pipeline_mode = #tpu.pipeline_mode<synchronous>, transform_indices = @transform_15, window_bounds = array<i64: 128, 128>}, {pipeline_mode = #tpu.pipeline_mode<synchronous>, transform_indices = @transform_16, window_bounds = array<i64: 1, 128>}, {pipeline_mode = #tpu.pipeline_mode<synchronous>, transform_indices = @transform_17, window_bounds = array<i64: 128, 128>}, {pipeline_mode = #tpu.pipeline_mode<synchronous>, transform_indices = @transform_18, window_bounds = array<i64: 1, 128>}, {transform_indices = @transform_19, window_bounds = array<i64: 8, 128>}, {transform_indices = @transform_20, window_bounds = array<i64: 8, 128>}, {transform_indices = @transform_21, window_bounds = array<i64: 8, 128>}, {transform_indices = @transform_22, window_bounds = array<i64: 8, 128>}, {transform_indices = @transform_23, window_bounds = array<i64: 8, 128>}, {transform_indices = @transform_24, window_bounds = array<i64: 8, 128>}]} {
    %c0 = arith.constant 0 : index
    %c0_0 = arith.constant 0 : index
    %c0_1 = arith.constant 0 : index
    %0 = vector.load %arg1[%c0, %c0_0, %c0_1] : memref<8x4x128xf32, #tpu.memory_space<vmem>>, vector<8x4x128xf32>
    %1 = vector.extract_strided_slice %0 {offsets = [0, 0, 0], sizes = [8, 1, 128], strides = [1, 1, 1]} : vector<8x4x128xf32> to vector<8x1x128xf32>
    %2 = vector.shape_cast %1 : vector<8x1x128xf32> to vector<8x128xf32>
    %c0_2 = arith.constant 0 : index
    %c0_3 = arith.constant 0 : index
    %3 = memref.load %arg2[%c0_2, %c0_3] : memref<1x4xf32, #tpu.memory_space<smem>>
    %4 = vector.broadcast %3 : f32 to vector<8x128xf32>
    %5 = arith.mulf %2, %4 : vector<8x128xf32>
    %6 = vector.extract_strided_slice %0 {offsets = [0, 1, 0], sizes = [8, 1, 128], strides = [1, 1, 1]} : vector<8x4x128xf32> to vector<8x1x128xf32>
    %7 = vector.shape_cast %6 : vector<8x1x128xf32> to vector<8x128xf32>
    %c0_4 = arith.constant 0 : index
    %c1 = arith.constant 1 : index
    %8 = memref.load %arg2[%c0_4, %c1] : memref<1x4xf32, #tpu.memory_space<smem>>
    %9 = vector.broadcast %8 : f32 to vector<8x128xf32>
    %10 = arith.mulf %7, %9 : vector<8x128xf32>
    %11 = vector.extract_strided_slice %0 {offsets = [0, 2, 0], sizes = [8, 1, 128], strides = [1, 1, 1]} : vector<8x4x128xf32> to vector<8x1x128xf32>
    %12 = vector.shape_cast %11 : vector<8x1x128xf32> to vector<8x128xf32>
    %c0_5 = arith.constant 0 : index
    %c2 = arith.constant 2 : index
    %13 = memref.load %arg2[%c0_5, %c2] : memref<1x4xf32, #tpu.memory_space<smem>>
    %14 = vector.broadcast %13 : f32 to vector<8x128xf32>
    %15 = arith.mulf %12, %14 : vector<8x128xf32>
    %16 = arith.addf %5, %15 : vector<8x128xf32>
    %17 = vector.extract_strided_slice %0 {offsets = [0, 3, 0], sizes = [8, 1, 128], strides = [1, 1, 1]} : vector<8x4x128xf32> to vector<8x1x128xf32>
    %18 = vector.shape_cast %17 : vector<8x1x128xf32> to vector<8x128xf32>
    %c0_6 = arith.constant 0 : index
    %c3 = arith.constant 3 : index
    %19 = memref.load %arg2[%c0_6, %c3] : memref<1x4xf32, #tpu.memory_space<smem>>
    %20 = vector.broadcast %19 : f32 to vector<8x128xf32>
    %21 = arith.mulf %18, %20 : vector<8x128xf32>
    %22 = arith.addf %10, %21 : vector<8x128xf32>
    %23 = arith.addf %16, %22 : vector<8x128xf32>
    %c0_7 = arith.constant 0 : index
    %c0_8 = arith.constant 0 : index
    %24 = memref.load %arg3[%c0_7, %c0_8] : memref<1x1xf32, #tpu.memory_space<smem>>
    %25 = vector.broadcast %24 : f32 to vector<8x128xf32>
    %26 = arith.addf %23, %25 : vector<8x128xf32>
    %c0_9 = arith.constant 0 : index
    %c0_10 = arith.constant 0 : index
    %27 = vector.load %arg25[%c0_9, %c0_10] : memref<8x128xf32, #tpu.memory_space<vmem>>, vector<8x128xf32>
    tpu.vector_store %arg25[%c0_9, %c0_10], %26 {strides = array<i32>} : memref<8x128xf32, #tpu.memory_space<vmem>>, vector<8x128xf32>,
    %c0_11 = arith.constant 0 : index
    %c0_12 = arith.constant 0 : index
    %28 = vector.load %arg4[%c0_11, %c0_12] : memref<128x128xf32, #tpu.memory_space<vmem>>, vector<128x128xf32>
    %cst = arith.constant dense<0.000000e+00> : vector<8x128xf32>
    %29 = tpu.matmul %26, %28, %cst {dimension_numbers = #tpu.dot_dimension_numbers<[1], [0], [0], [1], [0, 0, 1, 1], [], []>} : vector<8x128xf32>, vector<128x128xf32>, vector<8x128xf32> -> vector<8x128xf32>
    %c0_13 = arith.constant 0 : index
    %c0_14 = arith.constant 0 : index
    %30 = vector.load %arg5[%c0_13, %c0_14] : memref<1x128xf32, #tpu.memory_space<vmem>>, vector<1x128xf32>
    %31 = vector.broadcast %30 : vector<1x128xf32> to vector<8x128xf32>
    %32 = arith.addf %29, %31 : vector<8x128xf32>
    %cst_15 = arith.constant 0.000000e+00 : f32
    %33 = vector.broadcast %cst_15 : f32 to vector<8x128xf32>
    %34 = arith.maximumf %32, %33 : vector<8x128xf32>
    %c0_16 = arith.constant 0 : index
    %c0_17 = arith.constant 0 : index
    %35 = vector.load %arg21[%c0_16, %c0_17] : memref<8x128xf32, #tpu.memory_space<vmem>>, vector<8x128xf32>
    tpu.vector_store %arg21[%c0_16, %c0_17], %34 {strides = array<i32>} : memref<8x128xf32, #tpu.memory_space<vmem>>, vector<8x128xf32>,
    %c0_18 = arith.constant 0 : index
    %c0_19 = arith.constant 0 : index
    %36 = vector.load %arg6[%c0_18, %c0_19] : memref<128x128xf32, #tpu.memory_space<vmem>>, vector<128x128xf32>
    %cst_20 = arith.constant dense<0.000000e+00> : vector<8x128xf32>
    %37 = tpu.matmul %34, %36, %cst_20 {dimension_numbers = #tpu.dot_dimension_numbers<[1], [0], [0], [1], [0, 0, 1, 1], [], []>} : vector<8x128xf32>, vector<128x128xf32>, vector<8x128xf32> -> vector<8x128xf32>
    %c0_21 = arith.constant 0 : index
    %c0_22 = arith.constant 0 : index
    %38 = vector.load %arg7[%c0_21, %c0_22] : memref<1x128xf32, #tpu.memory_space<vmem>>, vector<1x128xf32>
    %39 = vector.broadcast %38 : vector<1x128xf32> to vector<8x128xf32>
    %40 = arith.addf %37, %39 : vector<8x128xf32>
    %cst_23 = arith.constant 0.000000e+00 : f32
    %41 = vector.broadcast %cst_23 : f32 to vector<8x128xf32>
    %42 = arith.maximumf %40, %41 : vector<8x128xf32>
    %c0_24 = arith.constant 0 : index
    %c0_25 = arith.constant 0 : index
    %43 = vector.load %arg22[%c0_24, %c0_25] : memref<8x128xf32, #tpu.memory_space<vmem>>, vector<8x128xf32>
    tpu.vector_store %arg22[%c0_24, %c0_25], %42 {strides = array<i32>} : memref<8x128xf32, #tpu.memory_space<vmem>>, vector<8x128xf32>,
    %c0_26 = arith.constant 0 : index
    %c0_27 = arith.constant 0 : index
    %44 = vector.load %arg8[%c0_26, %c0_27] : memref<128x128xf32, #tpu.memory_space<vmem>>, vector<128x128xf32>
    %cst_28 = arith.constant dense<0.000000e+00> : vector<8x128xf32>
    %45 = tpu.matmul %42, %44, %cst_28 {dimension_numbers = #tpu.dot_dimension_numbers<[1], [0], [0], [1], [0, 0, 1, 1], [], []>} : vector<8x128xf32>, vector<128x128xf32>, vector<8x128xf32> -> vector<8x128xf32>
    %c0_29 = arith.constant 0 : index
    %c0_30 = arith.constant 0 : index
    %46 = vector.load %arg9[%c0_29, %c0_30] : memref<1x128xf32, #tpu.memory_space<vmem>>, vector<1x128xf32>
    %47 = vector.broadcast %46 : vector<1x128xf32> to vector<8x128xf32>
    %48 = arith.addf %45, %47 : vector<8x128xf32>
    %cst_31 = arith.constant 0.000000e+00 : f32
    %49 = vector.broadcast %cst_31 : f32 to vector<8x128xf32>
    %50 = arith.maximumf %48, %49 : vector<8x128xf32>
    %c0_32 = arith.constant 0 : index
    %c0_33 = arith.constant 0 : index
    %51 = vector.load %arg23[%c0_32, %c0_33] : memref<8x128xf32, #tpu.memory_space<vmem>>, vector<8x128xf32>
    tpu.vector_store %arg23[%c0_32, %c0_33], %50 {strides = array<i32>} : memref<8x128xf32, #tpu.memory_space<vmem>>, vector<8x128xf32>,
    %c0_34 = arith.constant 0 : index
    %c0_35 = arith.constant 0 : index
    %52 = vector.load %arg10[%c0_34, %c0_35] : memref<128x128xf32, #tpu.memory_space<vmem>>, vector<128x128xf32>
    %cst_36 = arith.constant dense<0.000000e+00> : vector<8x128xf32>
    %53 = tpu.matmul %50, %52, %cst_36 {dimension_numbers = #tpu.dot_dimension_numbers<[1], [0], [0], [1], [0, 0, 1, 1], [], []>} : vector<8x128xf32>, vector<128x128xf32>, vector<8x128xf32> -> vector<8x128xf32>
    %c0_37 = arith.constant 0 : index
    %c0_38 = arith.constant 0 : index
    %54 = vector.load %arg11[%c0_37, %c0_38] : memref<1x128xf32, #tpu.memory_space<vmem>>, vector<1x128xf32>
    %55 = vector.broadcast %54 : vector<1x128xf32> to vector<8x128xf32>
    %56 = arith.addf %53, %55 : vector<8x128xf32>
    %c0_39 = arith.constant 0 : index
    %c0_40 = arith.constant 0 : index
    %57 = vector.load %arg24[%c0_39, %c0_40] : memref<8x128xf32, #tpu.memory_space<vmem>>, vector<8x128xf32>
    tpu.vector_store %arg24[%c0_39, %c0_40], %56 {strides = array<i32>} : memref<8x128xf32, #tpu.memory_space<vmem>>, vector<8x128xf32>,
    %c0_41 = arith.constant 0 : index
    %c0_42 = arith.constant 0 : index
    %58 = vector.load %arg12[%c0_41, %c0_42] : memref<128x128xf32, #tpu.memory_space<vmem>>, vector<128x128xf32>
    %cst_43 = arith.constant dense<0.000000e+00> : vector<8x128xf32>
    %59 = tpu.matmul %56, %58, %cst_43 {dimension_numbers = #tpu.dot_dimension_numbers<[1], [0], [0], [1], [0, 0, 1, 1], [], []>} : vector<8x128xf32>, vector<128x128xf32>, vector<8x128xf32> -> vector<8x128xf32>
    %c0_44 = arith.constant 0 : index
    %c0_45 = arith.constant 0 : index
    %60 = vector.load %arg13[%c0_44, %c0_45] : memref<1x128xf32, #tpu.memory_space<vmem>>, vector<1x128xf32>
    %61 = vector.broadcast %60 : vector<1x128xf32> to vector<8x128xf32>
    %62 = arith.addf %59, %61 : vector<8x128xf32>
    %cst_46 = arith.constant 0.000000e+00 : f32
    %63 = vector.broadcast %cst_46 : f32 to vector<8x128xf32>
    %64 = arith.maximumf %62, %63 : vector<8x128xf32>
    %c0_47 = arith.constant 0 : index
    %c0_48 = arith.constant 0 : index
    %65 = vector.load %arg14[%c0_47, %c0_48] : memref<128x128xf32, #tpu.memory_space<vmem>>, vector<128x128xf32>
    %cst_49 = arith.constant dense<0.000000e+00> : vector<8x128xf32>
    %66 = tpu.matmul %64, %65, %cst_49 {dimension_numbers = #tpu.dot_dimension_numbers<[1], [0], [0], [1], [0, 0, 1, 1], [], []>} : vector<8x128xf32>, vector<128x128xf32>, vector<8x128xf32> -> vector<8x128xf32>
    %c0_50 = arith.constant 0 : index
    %c0_51 = arith.constant 0 : index
    %67 = vector.load %arg15[%c0_50, %c0_51] : memref<1x128xf32, #tpu.memory_space<vmem>>, vector<1x128xf32>
    %68 = vector.broadcast %67 : vector<1x128xf32> to vector<8x128xf32>
    %69 = arith.addf %66, %68 : vector<8x128xf32>
    %cst_52 = arith.constant 0.000000e+00 : f32
    %70 = vector.broadcast %cst_52 : f32 to vector<8x128xf32>
    %71 = arith.maximumf %69, %70 : vector<8x128xf32>
    %c0_53 = arith.constant 0 : index
    %c0_54 = arith.constant 0 : index
    %72 = vector.load %arg16[%c0_53, %c0_54] : memref<128x128xf32, #tpu.memory_space<vmem>>, vector<128x128xf32>
    %cst_55 = arith.constant dense<0.000000e+00> : vector<8x128xf32>
    %73 = tpu.matmul %71, %72, %cst_55 {dimension_numbers = #tpu.dot_dimension_numbers<[1], [0], [0], [1], [0, 0, 1, 1], [], []>} : vector<8x128xf32>, vector<128x128xf32>, vector<8x128xf32> -> vector<8x128xf32>
    %c0_56 = arith.constant 0 : index
    %c0_57 = arith.constant 0 : index
    %74 = vector.load %arg17[%c0_56, %c0_57] : memref<1x128xf32, #tpu.memory_space<vmem>>, vector<1x128xf32>
    %75 = vector.broadcast %74 : vector<1x128xf32> to vector<8x128xf32>
    %76 = arith.addf %73, %75 : vector<8x128xf32>
    %cst_58 = arith.constant 0.000000e+00 : f32
    %77 = vector.broadcast %cst_58 : f32 to vector<8x128xf32>
    %78 = arith.maximumf %76, %77 : vector<8x128xf32>
    %c0_59 = arith.constant 0 : index
    %c0_60 = arith.constant 0 : index
    %79 = vector.load %arg18[%c0_59, %c0_60] : memref<128x128xf32, #tpu.memory_space<vmem>>, vector<128x128xf32>
    %cst_61 = arith.constant dense<0.000000e+00> : vector<8x128xf32>
    %80 = tpu.matmul %78, %79, %cst_61 {dimension_numbers = #tpu.dot_dimension_numbers<[1], [0], [0], [1], [0, 0, 1, 1], [], []>} : vector<8x128xf32>, vector<128x128xf32>, vector<8x128xf32> -> vector<8x128xf32>
    %c0_62 = arith.constant 0 : index
    %c0_63 = arith.constant 0 : index
    %81 = vector.load %arg19[%c0_62, %c0_63] : memref<1x128xf32, #tpu.memory_space<vmem>>, vector<1x128xf32>
    %82 = vector.broadcast %81 : vector<1x128xf32> to vector<8x128xf32>
    %83 = arith.addf %80, %82 : vector<8x128xf32>
    %c0_64 = arith.constant 0 : index
    %c0_65 = arith.constant 0 : index
    %84 = vector.load %arg20[%c0_64, %c0_65] : memref<8x128xf32, #tpu.memory_space<vmem>>, vector<8x128xf32>
    tpu.vector_store %arg20[%c0_64, %c0_65], %83 {strides = array<i32>} : memref<8x128xf32, #tpu.memory_space<vmem>>, vector<8x128xf32>,
    return
  }
  func.func @transform_0(%arg0: i32) -> (i32, i32, i32) {
    %c0_i32 = arith.constant 0 : i32
    %c0_i32_0 = arith.constant 0 : i32
    %c0_i32_1 = arith.constant 0 : i32
    return %arg0, %c0_i32, %c0_i32_0 : i32, i32, i32
  }
  func.func @transform_1(%arg0: i32) -> (i32, i32) {
    %c0_i32 = arith.constant 0 : i32
    %c0_i32_0 = arith.constant 0 : i32
    %c0_i32_1 = arith.constant 0 : i32
    return %c0_i32, %c0_i32_0 : i32, i32
  }
  func.func @transform_2(%arg0: i32) -> (i32, i32) {
    %c0_i32 = arith.constant 0 : i32
    %c0_i32_0 = arith.constant 0 : i32
    %c0_i32_1 = arith.constant 0 : i32
    return %c0_i32, %c0_i32_0 : i32, i32
  }
  func.func @transform_3(%arg0: i32) -> (i32, i32) {
    %c0_i32 = arith.constant 0 : i32
    %c0_i32_0 = arith.constant 0 : i32
    %c0_i32_1 = arith.constant 0 : i32
    return %c0_i32, %c0_i32_0 : i32, i32
  }
  func.func @transform_4(%arg0: i32) -> (i32, i32) {
    %c0_i32 = arith.constant 0 : i32
    %c0_i32_0 = arith.constant 0 : i32
    %c0_i32_1 = arith.constant 0 : i32
    return %c0_i32, %c0_i32_0 : i32, i32
  }
  func.func @transform_5(%arg0: i32) -> (i32, i32) {
    %c0_i32 = arith.constant 0 : i32
    %c0_i32_0 = arith.constant 0 : i32
    %c0_i32_1 = arith.constant 0 : i32
    return %c0_i32, %c0_i32_0 : i32, i32
  }
  func.func @transform_6(%arg0: i32) -> (i32, i32) {
    %c0_i32 = arith.constant 0 : i32
    %c0_i32_0 = arith.constant 0 : i32
    %c0_i32_1 = arith.constant 0 : i32
    return %c0_i32, %c0_i32_0 : i32, i32
  }
  func.func @transform_7(%arg0: i32) -> (i32, i32) {
    %c0_i32 = arith.constant 0 : i32
    %c0_i32_0 = arith.constant 0 : i32
    %c0_i32_1 = arith.constant 0 : i32
    return %c0_i32, %c0_i32_0 : i32, i32
  }
  func.func @transform_8(%arg0: i32) -> (i32, i32) {
    %c0_i32 = arith.constant 0 : i32
    %c0_i32_0 = arith.constant 0 : i32
    %c0_i32_1 = arith.constant 0 : i32
    return %c0_i32, %c0_i32_0 : i32, i32
  }
  func.func @transform_9(%arg0: i32) -> (i32, i32) {
    %c0_i32 = arith.constant 0 : i32
    %c0_i32_0 = arith.constant 0 : i32
    %c0_i32_1 = arith.constant 0 : i32
    return %c0_i32, %c0_i32_0 : i32, i32
  }
  func.func @transform_10(%arg0: i32) -> (i32, i32) {
    %c0_i32 = arith.constant 0 : i32
    %c0_i32_0 = arith.constant 0 : i32
    %c0_i32_1 = arith.constant 0 : i32
    return %c0_i32, %c0_i32_0 : i32, i32
  }
  func.func @transform_11(%arg0: i32) -> (i32, i32) {
    %c0_i32 = arith.constant 0 : i32
    %c0_i32_0 = arith.constant 0 : i32
    %c0_i32_1 = arith.constant 0 : i32
    return %c0_i32, %c0_i32_0 : i32, i32
  }
  func.func @transform_12(%arg0: i32) -> (i32, i32) {
    %c0_i32 = arith.constant 0 : i32
    %c0_i32_0 = arith.constant 0 : i32
    %c0_i32_1 = arith.constant 0 : i32
    return %c0_i32, %c0_i32_0 : i32, i32
  }
  func.func @transform_13(%arg0: i32) -> (i32, i32) {
    %c0_i32 = arith.constant 0 : i32
    %c0_i32_0 = arith.constant 0 : i32
    %c0_i32_1 = arith.constant 0 : i32
    return %c0_i32, %c0_i32_0 : i32, i32
  }
  func.func @transform_14(%arg0: i32) -> (i32, i32) {
    %c0_i32 = arith.constant 0 : i32
    %c0_i32_0 = arith.constant 0 : i32
    %c0_i32_1 = arith.constant 0 : i32
    return %c0_i32, %c0_i32_0 : i32, i32
  }
  func.func @transform_15(%arg0: i32) -> (i32, i32) {
    %c0_i32 = arith.constant 0 : i32
    %c0_i32_0 = arith.constant 0 : i32
    %c0_i32_1 = arith.constant 0 : i32
    return %c0_i32, %c0_i32_0 : i32, i32
  }
  func.func @transform_16(%arg0: i32) -> (i32, i32) {
    %c0_i32 = arith.constant 0 : i32
    %c0_i32_0 = arith.constant 0 : i32
    %c0_i32_1 = arith.constant 0 : i32
    return %c0_i32, %c0_i32_0 : i32, i32
  }
  func.func @transform_17(%arg0: i32) -> (i32, i32) {
    %c0_i32 = arith.constant 0 : i32
    %c0_i32_0 = arith.constant 0 : i32
    %c0_i32_1 = arith.constant 0 : i32
    return %c0_i32, %c0_i32_0 : i32, i32
  }
  func.func @transform_18(%arg0: i32) -> (i32, i32) {
    %c0_i32 = arith.constant 0 : i32
    %c0_i32_0 = arith.constant 0 : i32
    %c0_i32_1 = arith.constant 0 : i32
    return %c0_i32, %c0_i32_0 : i32, i32
  }
  func.func @transform_19(%arg0: i32) -> (i32, i32) {
    %c0_i32 = arith.constant 0 : i32
    %c0_i32_0 = arith.constant 0 : i32
    return %arg0, %c0_i32 : i32, i32
  }
  func.func @transform_20(%arg0: i32) -> (i32, i32) {
    %c0_i32 = arith.constant 0 : i32
    %c0_i32_0 = arith.constant 0 : i32
    return %arg0, %c0_i32 : i32, i32
  }
  func.func @transform_21(%arg0: i32) -> (i32, i32) {
    %c0_i32 = arith.constant 0 : i32
    %c0_i32_0 = arith.constant 0 : i32
    return %arg0, %c0_i32 : i32, i32
  }
  func.func @transform_22(%arg0: i32) -> (i32, i32) {
    %c0_i32 = arith.constant 0 : i32
    %c0_i32_0 = arith.constant 0 : i32
    return %arg0, %c0_i32 : i32, i32
  }
  func.func @transform_23(%arg0: i32) -> (i32, i32) {
    %c0_i32 = arith.constant 0 : i32
    %c0_i32_0 = arith.constant 0 : i32
    return %arg0, %c0_i32 : i32, i32
  }
  func.func @transform_24(%arg0: i32) -> (i32, i32) {
    %c0_i32 = arith.constant 0 : i32
    %c0_i32_0 = arith.constant 0 : i32
    return %arg0, %c0_i32 : i32, i32
  }
}

module attributes {stable_mosaic.version = 11 : i64} {
  func.func @ae_kernel(%arg0: i32, %arg1: memref<8x4x128xf32, #tpu.memory_space<vmem>>, %arg2: memref<1x4xf32, #tpu.memory_space<smem>>, %arg3: memref<1x1xf32, #tpu.memory_space<smem>>, %arg4: memref<128x128xf32, #tpu.memory_space<vmem>>, %arg5: memref<1x128xf32, #tpu.memory_space<vmem>>, %arg6: memref<128x128xf32, #tpu.memory_space<vmem>>, %arg7: memref<1x128xf32, #tpu.memory_space<vmem>>, %arg8: memref<128x128xf32, #tpu.memory_space<vmem>>, %arg9: memref<1x128xf32, #tpu.memory_space<vmem>>, %arg10: memref<128x128xf32, #tpu.memory_space<vmem>>, %arg11: memref<1x128xf32, #tpu.memory_space<vmem>>, %arg12: memref<128x128xf32, #tpu.memory_space<vmem>>, %arg13: memref<1x128xf32, #tpu.memory_space<vmem>>, %arg14: memref<128x128xf32, #tpu.memory_space<vmem>>, %arg15: memref<1x128xf32, #tpu.memory_space<vmem>>, %arg16: memref<128x128xf32, #tpu.memory_space<vmem>>, %arg17: memref<1x128xf32, #tpu.memory_space<vmem>>, %arg18: memref<128x128xf32, #tpu.memory_space<vmem>>, %arg19: memref<1x128xf32, #tpu.memory_space<vmem>>, %arg20: memref<8x128xf32, #tpu.memory_space<vmem>>, %arg21: memref<8x128xf32, #tpu.memory_space<vmem>>, %arg22: memref<8x128xf32, #tpu.memory_space<vmem>>, %arg23: memref<8x128xf32, #tpu.memory_space<vmem>>, %arg24: memref<8x128xf32, #tpu.memory_space<vmem>>, %arg25: memref<8x128xf32, #tpu.memory_space<vmem>>) attributes {dimension_semantics = [#tpu.dimension_semantics<parallel>], iteration_bounds = array<i64: 1>, scalar_prefetch = 0 : i64, scratch_operands = 0 : i64, tpu.core_type = #tpu.core_type<tc>, window_params = [{transform_indices = @transform_0, window_bounds = array<i64: 8, 4, 128>}, {transform_indices = @transform_1, window_bounds = array<i64: 1, 4>}, {transform_indices = @transform_2, window_bounds = array<i64: 1, 1>}, {pipeline_mode = #tpu.pipeline_mode<synchronous>, transform_indices = @transform_3, window_bounds = array<i64: 128, 128>}, {pipeline_mode = #tpu.pipeline_mode<synchronous>, transform_indices = @transform_4, window_bounds = array<i64: 1, 128>}, {pipeline_mode = #tpu.pipeline_mode<synchronous>, transform_indices = @transform_5, window_bounds = array<i64: 128, 128>}, {pipeline_mode = #tpu.pipeline_mode<synchronous>, transform_indices = @transform_6, window_bounds = array<i64: 1, 128>}, {pipeline_mode = #tpu.pipeline_mode<synchronous>, transform_indices = @transform_7, window_bounds = array<i64: 128, 128>}, {pipeline_mode = #tpu.pipeline_mode<synchronous>, transform_indices = @transform_8, window_bounds = array<i64: 1, 128>}, {pipeline_mode = #tpu.pipeline_mode<synchronous>, transform_indices = @transform_9, window_bounds = array<i64: 128, 128>}, {pipeline_mode = #tpu.pipeline_mode<synchronous>, transform_indices = @transform_10, window_bounds = array<i64: 1, 128>}, {pipeline_mode = #tpu.pipeline_mode<synchronous>, transform_indices = @transform_11, window_bounds = array<i64: 128, 128>}, {pipeline_mode = #tpu.pipeline_mode<synchronous>, transform_indices = @transform_12, window_bounds = array<i64: 1, 128>}, {pipeline_mode = #tpu.pipeline_mode<synchronous>, transform_indices = @transform_13, window_bounds = array<i64: 128, 128>}, {pipeline_mode = #tpu.pipeline_mode<synchronous>, transform_indices = @transform_14, window_bounds = array<i64: 1, 128>}, {pipeline_mode = #tpu.pipeline_mode<synchronous>, transform_indices = @transform_15, window_bounds = array<i64: 128, 128>}, {pipeline_mode = #tpu.pipeline_mode<synchronous>, transform_indices = @transform_16, window_bounds = array<i64: 1, 128>}, {pipeline_mode = #tpu.pipeline_mode<synchronous>, transform_indices = @transform_17, window_bounds = array<i64: 128, 128>}, {pipeline_mode = #tpu.pipeline_mode<synchronous>, transform_indices = @transform_18, window_bounds = array<i64: 1, 128>}, {transform_indices = @transform_19, window_bounds = array<i64: 8, 128>}, {transform_indices = @transform_20, window_bounds = array<i64: 8, 128>}, {transform_indices = @transform_21, window_bounds = array<i64: 8, 128>}, {transform_indices = @transform_22, window_bounds = array<i64: 8, 128>}, {transform_indices = @transform_23, window_bounds = array<i64: 8, 128>}, {transform_indices = @transform_24, window_bounds = array<i64: 8, 128>}]} {
    %c0 = arith.constant 0 : index
    %c0_0 = arith.constant 0 : index
    %c0_1 = arith.constant 0 : index
    %0 = vector.load %arg1[%c0, %c0_0, %c0_1] : memref<8x4x128xf32, #tpu.memory_space<vmem>>, vector<8x4x128xf32>
    %1 = vector.extract_strided_slice %0 {offsets = [0, 0, 0], sizes = [8, 1, 128], strides = [1, 1, 1]} : vector<8x4x128xf32> to vector<8x1x128xf32>
    %2 = vector.shape_cast %1 : vector<8x1x128xf32> to vector<8x128xf32>
    %c0_2 = arith.constant 0 : index
    %c0_3 = arith.constant 0 : index
    %3 = memref.load %arg2[%c0_2, %c0_3] : memref<1x4xf32, #tpu.memory_space<smem>>
    %4 = vector.broadcast %3 : f32 to vector<8x128xf32>
    %5 = arith.mulf %2, %4 : vector<8x128xf32>
    %6 = vector.extract_strided_slice %0 {offsets = [0, 1, 0], sizes = [8, 1, 128], strides = [1, 1, 1]} : vector<8x4x128xf32> to vector<8x1x128xf32>
    %7 = vector.shape_cast %6 : vector<8x1x128xf32> to vector<8x128xf32>
    %c0_4 = arith.constant 0 : index
    %c1 = arith.constant 1 : index
    %8 = memref.load %arg2[%c0_4, %c1] : memref<1x4xf32, #tpu.memory_space<smem>>
    %9 = vector.broadcast %8 : f32 to vector<8x128xf32>
    %10 = arith.mulf %7, %9 : vector<8x128xf32>
    %11 = vector.extract_strided_slice %0 {offsets = [0, 2, 0], sizes = [8, 1, 128], strides = [1, 1, 1]} : vector<8x4x128xf32> to vector<8x1x128xf32>
    %12 = vector.shape_cast %11 : vector<8x1x128xf32> to vector<8x128xf32>
    %c0_5 = arith.constant 0 : index
    %c2 = arith.constant 2 : index
    %13 = memref.load %arg2[%c0_5, %c2] : memref<1x4xf32, #tpu.memory_space<smem>>
    %14 = vector.broadcast %13 : f32 to vector<8x128xf32>
    %15 = arith.mulf %12, %14 : vector<8x128xf32>
    %16 = arith.addf %5, %15 : vector<8x128xf32>
    %17 = vector.extract_strided_slice %0 {offsets = [0, 3, 0], sizes = [8, 1, 128], strides = [1, 1, 1]} : vector<8x4x128xf32> to vector<8x1x128xf32>
    %18 = vector.shape_cast %17 : vector<8x1x128xf32> to vector<8x128xf32>
    %c0_6 = arith.constant 0 : index
    %c3 = arith.constant 3 : index
    %19 = memref.load %arg2[%c0_6, %c3] : memref<1x4xf32, #tpu.memory_space<smem>>
    %20 = vector.broadcast %19 : f32 to vector<8x128xf32>
    %21 = arith.mulf %18, %20 : vector<8x128xf32>
    %22 = arith.addf %10, %21 : vector<8x128xf32>
    %23 = arith.addf %16, %22 : vector<8x128xf32>
    %c0_7 = arith.constant 0 : index
    %c0_8 = arith.constant 0 : index
    %24 = memref.load %arg3[%c0_7, %c0_8] : memref<1x1xf32, #tpu.memory_space<smem>>
    %25 = vector.broadcast %24 : f32 to vector<8x128xf32>
    %26 = arith.addf %23, %25 : vector<8x128xf32>
    %c0_9 = arith.constant 0 : index
    %c0_10 = arith.constant 0 : index
    %27 = vector.load %arg25[%c0_9, %c0_10] : memref<8x128xf32, #tpu.memory_space<vmem>>, vector<8x128xf32>
    tpu.vector_store %arg25[%c0_9, %c0_10], %26 {strides = array<i32>} : memref<8x128xf32, #tpu.memory_space<vmem>>, vector<8x128xf32>,
    %c0_11 = arith.constant 0 : index
    %c0_12 = arith.constant 0 : index
    %28 = vector.load %arg4[%c0_11, %c0_12] : memref<128x128xf32, #tpu.memory_space<vmem>>, vector<128x128xf32>
    %cst = arith.constant dense<0.000000e+00> : vector<8x128xf32>
    %29 = tpu.matmul %26, %28, %cst {dimension_numbers = #tpu.dot_dimension_numbers<[1], [0], [0], [1], [0, 0, 1, 1], [], []>} : vector<8x128xf32>, vector<128x128xf32>, vector<8x128xf32> -> vector<8x128xf32>
    %c0_13 = arith.constant 0 : index
    %c0_14 = arith.constant 0 : index
    %30 = vector.load %arg5[%c0_13, %c0_14] : memref<1x128xf32, #tpu.memory_space<vmem>>, vector<1x128xf32>
    %31 = vector.broadcast %30 : vector<1x128xf32> to vector<8x128xf32>
    %32 = arith.addf %29, %31 : vector<8x128xf32>
    %cst_15 = arith.constant 0.000000e+00 : f32
    %33 = vector.broadcast %cst_15 : f32 to vector<8x128xf32>
    %34 = arith.maximumf %32, %33 : vector<8x128xf32>
    %c0_16 = arith.constant 0 : index
    %c0_17 = arith.constant 0 : index
    %35 = vector.load %arg21[%c0_16, %c0_17] : memref<8x128xf32, #tpu.memory_space<vmem>>, vector<8x128xf32>
    tpu.vector_store %arg21[%c0_16, %c0_17], %34 {strides = array<i32>} : memref<8x128xf32, #tpu.memory_space<vmem>>, vector<8x128xf32>,
    %c0_18 = arith.constant 0 : index
    %c0_19 = arith.constant 0 : index
    %36 = vector.load %arg6[%c0_18, %c0_19] : memref<128x128xf32, #tpu.memory_space<vmem>>, vector<128x128xf32>
    %cst_20 = arith.constant dense<0.000000e+00> : vector<8x128xf32>
    %37 = tpu.matmul %34, %36, %cst_20 {dimension_numbers = #tpu.dot_dimension_numbers<[1], [0], [0], [1], [0, 0, 1, 1], [], []>} : vector<8x128xf32>, vector<128x128xf32>, vector<8x128xf32> -> vector<8x128xf32>
    %c0_21 = arith.constant 0 : index
    %c0_22 = arith.constant 0 : index
    %38 = vector.load %arg7[%c0_21, %c0_22] : memref<1x128xf32, #tpu.memory_space<vmem>>, vector<1x128xf32>
    %39 = vector.broadcast %38 : vector<1x128xf32> to vector<8x128xf32>
    %40 = arith.addf %37, %39 : vector<8x128xf32>
    %cst_23 = arith.constant 0.000000e+00 : f32
    %41 = vector.broadcast %cst_23 : f32 to vector<8x128xf32>
    %42 = arith.maximumf %40, %41 : vector<8x128xf32>
    %c0_24 = arith.constant 0 : index
    %c0_25 = arith.constant 0 : index
    %43 = vector.load %arg22[%c0_24, %c0_25] : memref<8x128xf32, #tpu.memory_space<vmem>>, vector<8x128xf32>
    tpu.vector_store %arg22[%c0_24, %c0_25], %42 {strides = array<i32>} : memref<8x128xf32, #tpu.memory_space<vmem>>, vector<8x128xf32>,
    %c0_26 = arith.constant 0 : index
    %c0_27 = arith.constant 0 : index
    %44 = vector.load %arg8[%c0_26, %c0_27] : memref<128x128xf32, #tpu.memory_space<vmem>>, vector<128x128xf32>
    %cst_28 = arith.constant dense<0.000000e+00> : vector<8x128xf32>
    %45 = tpu.matmul %42, %44, %cst_28 {dimension_numbers = #tpu.dot_dimension_numbers<[1], [0], [0], [1], [0, 0, 1, 1], [], []>} : vector<8x128xf32>, vector<128x128xf32>, vector<8x128xf32> -> vector<8x128xf32>
    %c0_29 = arith.constant 0 : index
    %c0_30 = arith.constant 0 : index
    %46 = vector.load %arg9[%c0_29, %c0_30] : memref<1x128xf32, #tpu.memory_space<vmem>>, vector<1x128xf32>
    %47 = vector.broadcast %46 : vector<1x128xf32> to vector<8x128xf32>
    %48 = arith.addf %45, %47 : vector<8x128xf32>
    %cst_31 = arith.constant 0.000000e+00 : f32
    %49 = vector.broadcast %cst_31 : f32 to vector<8x128xf32>
    %50 = arith.maximumf %48, %49 : vector<8x128xf32>
    %c0_32 = arith.constant 0 : index
    %c0_33 = arith.constant 0 : index
    %51 = vector.load %arg23[%c0_32, %c0_33] : memref<8x128xf32, #tpu.memory_space<vmem>>, vector<8x128xf32>
    tpu.vector_store %arg23[%c0_32, %c0_33], %50 {strides = array<i32>} : memref<8x128xf32, #tpu.memory_space<vmem>>, vector<8x128xf32>,
    %c0_34 = arith.constant 0 : index
    %c0_35 = arith.constant 0 : index
    %52 = vector.load %arg10[%c0_34, %c0_35] : memref<128x128xf32, #tpu.memory_space<vmem>>, vector<128x128xf32>
    %cst_36 = arith.constant dense<0.000000e+00> : vector<8x128xf32>
    %53 = tpu.matmul %50, %52, %cst_36 {dimension_numbers = #tpu.dot_dimension_numbers<[1], [0], [0], [1], [0, 0, 1, 1], [], []>} : vector<8x128xf32>, vector<128x128xf32>, vector<8x128xf32> -> vector<8x128xf32>
    %c0_37 = arith.constant 0 : index
    %c0_38 = arith.constant 0 : index
    %54 = vector.load %arg11[%c0_37, %c0_38] : memref<1x128xf32, #tpu.memory_space<vmem>>, vector<1x128xf32>
    %55 = vector.broadcast %54 : vector<1x128xf32> to vector<8x128xf32>
    %56 = arith.addf %53, %55 : vector<8x128xf32>
    %c0_39 = arith.constant 0 : index
    %c0_40 = arith.constant 0 : index
    %57 = vector.load %arg24[%c0_39, %c0_40] : memref<8x128xf32, #tpu.memory_space<vmem>>, vector<8x128xf32>
    tpu.vector_store %arg24[%c0_39, %c0_40], %56 {strides = array<i32>} : memref<8x128xf32, #tpu.memory_space<vmem>>, vector<8x128xf32>,
    %c0_41 = arith.constant 0 : index
    %c0_42 = arith.constant 0 : index
    %58 = vector.load %arg12[%c0_41, %c0_42] : memref<128x128xf32, #tpu.memory_space<vmem>>, vector<128x128xf32>
    %cst_43 = arith.constant dense<0.000000e+00> : vector<8x128xf32>
    %59 = tpu.matmul %56, %58, %cst_43 {dimension_numbers = #tpu.dot_dimension_numbers<[1], [0], [0], [1], [0, 0, 1, 1], [], []>} : vector<8x128xf32>, vector<128x128xf32>, vector<8x128xf32> -> vector<8x128xf32>
    %c0_44 = arith.constant 0 : index
    %c0_45 = arith.constant 0 : index
    %60 = vector.load %arg13[%c0_44, %c0_45] : memref<1x128xf32, #tpu.memory_space<vmem>>, vector<1x128xf32>
    %61 = vector.broadcast %60 : vector<1x128xf32> to vector<8x128xf32>
    %62 = arith.addf %59, %61 : vector<8x128xf32>
    %cst_46 = arith.constant 0.000000e+00 : f32
    %63 = vector.broadcast %cst_46 : f32 to vector<8x128xf32>
    %64 = arith.maximumf %62, %63 : vector<8x128xf32>
    %c0_47 = arith.constant 0 : index
    %c0_48 = arith.constant 0 : index
    %65 = vector.load %arg14[%c0_47, %c0_48] : memref<128x128xf32, #tpu.memory_space<vmem>>, vector<128x128xf32>
    %cst_49 = arith.constant dense<0.000000e+00> : vector<8x128xf32>
    %66 = tpu.matmul %64, %65, %cst_49 {dimension_numbers = #tpu.dot_dimension_numbers<[1], [0], [0], [1], [0, 0, 1, 1], [], []>} : vector<8x128xf32>, vector<128x128xf32>, vector<8x128xf32> -> vector<8x128xf32>
    %c0_50 = arith.constant 0 : index
    %c0_51 = arith.constant 0 : index
    %67 = vector.load %arg15[%c0_50, %c0_51] : memref<1x128xf32, #tpu.memory_space<vmem>>, vector<1x128xf32>
    %68 = vector.broadcast %67 : vector<1x128xf32> to vector<8x128xf32>
    %69 = arith.addf %66, %68 : vector<8x128xf32>
    %cst_52 = arith.constant 0.000000e+00 : f32
    %70 = vector.broadcast %cst_52 : f32 to vector<8x128xf32>
    %71 = arith.maximumf %69, %70 : vector<8x128xf32>
    %c0_53 = arith.constant 0 : index
    %c0_54 = arith.constant 0 : index
    %72 = vector.load %arg16[%c0_53, %c0_54] : memref<128x128xf32, #tpu.memory_space<vmem>>, vector<128x128xf32>
    %cst_55 = arith.constant dense<0.000000e+00> : vector<8x128xf32>
    %73 = tpu.matmul %71, %72, %cst_55 {dimension_numbers = #tpu.dot_dimension_numbers<[1], [0], [0], [1], [0, 0, 1, 1], [], []>} : vector<8x128xf32>, vector<128x128xf32>, vector<8x128xf32> -> vector<8x128xf32>
    %c0_56 = arith.constant 0 : index
    %c0_57 = arith.constant 0 : index
    %74 = vector.load %arg17[%c0_56, %c0_57] : memref<1x128xf32, #tpu.memory_space<vmem>>, vector<1x128xf32>
    %75 = vector.broadcast %74 : vector<1x128xf32> to vector<8x128xf32>
    %76 = arith.addf %73, %75 : vector<8x128xf32>
    %cst_58 = arith.constant 0.000000e+00 : f32
    %77 = vector.broadcast %cst_58 : f32 to vector<8x128xf32>
    %78 = arith.maximumf %76, %77 : vector<8x128xf32>
    %c0_59 = arith.constant 0 : index
    %c0_60 = arith.constant 0 : index
    %79 = vector.load %arg18[%c0_59, %c0_60] : memref<128x128xf32, #tpu.memory_space<vmem>>, vector<128x128xf32>
    %cst_61 = arith.constant dense<0.000000e+00> : vector<8x128xf32>
    %80 = tpu.matmul %78, %79, %cst_61 {dimension_numbers = #tpu.dot_dimension_numbers<[1], [0], [0], [1], [0, 0, 1, 1], [], []>} : vector<8x128xf32>, vector<128x128xf32>, vector<8x128xf32> -> vector<8x128xf32>
    %c0_62 = arith.constant 0 : index
    %c0_63 = arith.constant 0 : index
    %81 = vector.load %arg19[%c0_62, %c0_63] : memref<1x128xf32, #tpu.memory_space<vmem>>, vector<1x128xf32>
    %82 = vector.broadcast %81 : vector<1x128xf32> to vector<8x128xf32>
    %83 = arith.addf %80, %82 : vector<8x128xf32>
    %c0_64 = arith.constant 0 : index
    %c0_65 = arith.constant 0 : index
    %84 = vector.load %arg20[%c0_64, %c0_65] : memref<8x128xf32, #tpu.memory_space<vmem>>, vector<8x128xf32>
    tpu.vector_store %arg20[%c0_64, %c0_65], %83 {strides = array<i32>} : memref<8x128xf32, #tpu.memory_space<vmem>>, vector<8x128xf32>,
    return
  }
  func.func @transform_0(%arg0: i32) -> (i32, i32, i32) {
    %c0_i32 = arith.constant 0 : i32
    %c0_i32_0 = arith.constant 0 : i32
    %c0_i32_1 = arith.constant 0 : i32
    return %arg0, %c0_i32, %c0_i32_0 : i32, i32, i32
  }
  func.func @transform_1(%arg0: i32) -> (i32, i32) {
    %c0_i32 = arith.constant 0 : i32
    %c0_i32_0 = arith.constant 0 : i32
    %c0_i32_1 = arith.constant 0 : i32
    return %c0_i32, %c0_i32_0 : i32, i32
  }
  func.func @transform_2(%arg0: i32) -> (i32, i32) {
    %c0_i32 = arith.constant 0 : i32
    %c0_i32_0 = arith.constant 0 : i32
    %c0_i32_1 = arith.constant 0 : i32
    return %c0_i32, %c0_i32_0 : i32, i32
  }
  func.func @transform_3(%arg0: i32) -> (i32, i32) {
    %c0_i32 = arith.constant 0 : i32
    %c0_i32_0 = arith.constant 0 : i32
    %c0_i32_1 = arith.constant 0 : i32
    return %c0_i32, %c0_i32_0 : i32, i32
  }
  func.func @transform_4(%arg0: i32) -> (i32, i32) {
    %c0_i32 = arith.constant 0 : i32
    %c0_i32_0 = arith.constant 0 : i32
    %c0_i32_1 = arith.constant 0 : i32
    return %c0_i32, %c0_i32_0 : i32, i32
  }
  func.func @transform_5(%arg0: i32) -> (i32, i32) {
    %c0_i32 = arith.constant 0 : i32
    %c0_i32_0 = arith.constant 0 : i32
    %c0_i32_1 = arith.constant 0 : i32
    return %c0_i32, %c0_i32_0 : i32, i32
  }
  func.func @transform_6(%arg0: i32) -> (i32, i32) {
    %c0_i32 = arith.constant 0 : i32
    %c0_i32_0 = arith.constant 0 : i32
    %c0_i32_1 = arith.constant 0 : i32
    return %c0_i32, %c0_i32_0 : i32, i32
  }
  func.func @transform_7(%arg0: i32) -> (i32, i32) {
    %c0_i32 = arith.constant 0 : i32
    %c0_i32_0 = arith.constant 0 : i32
    %c0_i32_1 = arith.constant 0 : i32
    return %c0_i32, %c0_i32_0 : i32, i32
  }
  func.func @transform_8(%arg0: i32) -> (i32, i32) {
    %c0_i32 = arith.constant 0 : i32
    %c0_i32_0 = arith.constant 0 : i32
    %c0_i32_1 = arith.constant 0 : i32
    return %c0_i32, %c0_i32_0 : i32, i32
  }
  func.func @transform_9(%arg0: i32) -> (i32, i32) {
    %c0_i32 = arith.constant 0 : i32
    %c0_i32_0 = arith.constant 0 : i32
    %c0_i32_1 = arith.constant 0 : i32
    return %c0_i32, %c0_i32_0 : i32, i32
  }
  func.func @transform_10(%arg0: i32) -> (i32, i32) {
    %c0_i32 = arith.constant 0 : i32
    %c0_i32_0 = arith.constant 0 : i32
    %c0_i32_1 = arith.constant 0 : i32
    return %c0_i32, %c0_i32_0 : i32, i32
  }
  func.func @transform_11(%arg0: i32) -> (i32, i32) {
    %c0_i32 = arith.constant 0 : i32
    %c0_i32_0 = arith.constant 0 : i32
    %c0_i32_1 = arith.constant 0 : i32
    return %c0_i32, %c0_i32_0 : i32, i32
  }
  func.func @transform_12(%arg0: i32) -> (i32, i32) {
    %c0_i32 = arith.constant 0 : i32
    %c0_i32_0 = arith.constant 0 : i32
    %c0_i32_1 = arith.constant 0 : i32
    return %c0_i32, %c0_i32_0 : i32, i32
  }
  func.func @transform_13(%arg0: i32) -> (i32, i32) {
    %c0_i32 = arith.constant 0 : i32
    %c0_i32_0 = arith.constant 0 : i32
    %c0_i32_1 = arith.constant 0 : i32
    return %c0_i32, %c0_i32_0 : i32, i32
  }
  func.func @transform_14(%arg0: i32) -> (i32, i32) {
    %c0_i32 = arith.constant 0 : i32
    %c0_i32_0 = arith.constant 0 : i32
    %c0_i32_1 = arith.constant 0 : i32
    return %c0_i32, %c0_i32_0 : i32, i32
  }
  func.func @transform_15(%arg0: i32) -> (i32, i32) {
    %c0_i32 = arith.constant 0 : i32
    %c0_i32_0 = arith.constant 0 : i32
    %c0_i32_1 = arith.constant 0 : i32
    return %c0_i32, %c0_i32_0 : i32, i32
  }
  func.func @transform_16(%arg0: i32) -> (i32, i32) {
    %c0_i32 = arith.constant 0 : i32
    %c0_i32_0 = arith.constant 0 : i32
    %c0_i32_1 = arith.constant 0 : i32
    return %c0_i32, %c0_i32_0 : i32, i32
  }
  func.func @transform_17(%arg0: i32) -> (i32, i32) {
    %c0_i32 = arith.constant 0 : i32
    %c0_i32_0 = arith.constant 0 : i32
    %c0_i32_1 = arith.constant 0 : i32
    return %c0_i32, %c0_i32_0 : i32, i32
  }
  func.func @transform_18(%arg0: i32) -> (i32, i32) {
    %c0_i32 = arith.constant 0 : i32
    %c0_i32_0 = arith.constant 0 : i32
    %c0_i32_1 = arith.constant 0 : i32
    return %c0_i32, %c0_i32_0 : i32, i32
  }
  func.func @transform_19(%arg0: i32) -> (i32, i32) {
    %c0_i32 = arith.constant 0 : i32
    %c0_i32_0 = arith.constant 0 : i32
    return %arg0, %c0_i32 : i32, i32
  }
  func.func @transform_20(%arg0: i32) -> (i32, i32) {
    %c0_i32 = arith.constant 0 : i32
    %c0_i32_0 = arith.constant 0 : i32
    return %arg0, %c0_i32 : i32, i32
  }
  func.func @transform_21(%arg0: i32) -> (i32, i32) {
    %c0_i32 = arith.constant 0 : i32
    %c0_i32_0 = arith.constant 0 : i32
    return %arg0, %c0_i32 : i32, i32
  }
  func.func @transform_22(%arg0: i32) -> (i32, i32) {
    %c0_i32 = arith.constant 0 : i32
    %c0_i32_0 = arith.constant 0 : i32
    return %arg0, %c0_i32 : i32, i32
  }
  func.func @transform_23(%arg0: i32) -> (i32, i32) {
    %c0_i32 = arith.constant 0 : i32
    %c0_i32_0 = arith.constant 0 : i32
    return %arg0, %c0_i32 : i32, i32
  }
  func.func @transform_24(%arg0: i32) -> (i32, i32) {
    %c0_i32 = arith.constant 0 : i32
    %c0_i32_0 = arith.constant 0 : i32
    return %arg0, %c0_i32 : i32, i32
  }
}

</mosaic_0001>

<llo_original>
// kernel: tpu_custom_call.1
$region0: #{tpu_custom_call.1}
  #allocation0 [shape = 'u32[]', space=smem, size = 0x4, offset = 0x4, fixed_abs, tag = 'smem constant byte address 0x4 - core index']
  #allocation1 [shape = 'u32[72,128]{1,0:T(1,128)}', space=vmem, size = 0x9000, scoped, tag = 'internal scratch']
  #allocation2 [shape = 'f32[1,1]{1,0:T(1,128)S(6)}', space=smem, size = 0x200, scoped, tag = 'scoped memory for tpu_custom_call.1']
  %s0 = inlined_call_operand.hbm [shape: f32[8,4,128], index: 0, kind: input, shape index: {}]
  %s1 = inlined_call_operand.vmem [shape: f32[1,4], index: 1, kind: input, shape index: {}]
  %s2 = inlined_call_operand.<no memory space> [shape: f32[1,1], index: 2, kind: input, shape index: {}]
  %s3 = inlined_call_operand.hbm [shape: f32[128,128], index: 3, kind: input, shape index: {}]
  %s4 = inlined_call_operand.vmem [shape: f32[1,128], index: 4, kind: input, shape index: {}]
  %s5 = inlined_call_operand.hbm [shape: f32[128,128], index: 5, kind: input, shape index: {}]
  %s6 = inlined_call_operand.vmem [shape: f32[1,128], index: 6, kind: input, shape index: {}]
  %s7 = inlined_call_operand.hbm [shape: f32[128,128], index: 7, kind: input, shape index: {}]
  %s8 = inlined_call_operand.vmem [shape: f32[1,128], index: 8, kind: input, shape index: {}]
  %s9 = inlined_call_operand.hbm [shape: f32[128,128], index: 9, kind: input, shape index: {}]
  %s10 = inlined_call_operand.vmem [shape: f32[1,128], index: 10, kind: input, shape index: {}]
  %s11 = inlined_call_operand.hbm [shape: f32[128,128], index: 11, kind: input, shape index: {}]
  %s12 = inlined_call_operand.vmem [shape: f32[1,128], index: 12, kind: input, shape index: {}]
  %s13 = inlined_call_operand.hbm [shape: f32[128,128], index: 13, kind: input, shape index: {}]
  %s14 = inlined_call_operand.vmem [shape: f32[1,128], index: 14, kind: input, shape index: {}]
  %s15 = inlined_call_operand.hbm [shape: f32[128,128], index: 15, kind: input, shape index: {}]
  %s16 = inlined_call_operand.vmem [shape: f32[1,128], index: 16, kind: input, shape index: {}]
  %s17 = inlined_call_operand.hbm [shape: f32[128,128], index: 17, kind: input, shape index: {}]
  %s18 = inlined_call_operand.vmem [shape: f32[1,128], index: 18, kind: input, shape index: {}]
  %s19 = inlined_call_operand.hbm [shape: f32[8,128], index: 19, kind: output, shape index: {0}]
  %s20 = inlined_call_operand.hbm [shape: f32[8,128], index: 20, kind: output, shape index: {1}]
  %s21 = inlined_call_operand.hbm [shape: f32[8,128], index: 21, kind: output, shape index: {2}]
  %s22 = inlined_call_operand.hbm [shape: f32[8,128], index: 22, kind: output, shape index: {3}]
  %s23 = inlined_call_operand.hbm [shape: f32[8,128], index: 23, kind: output, shape index: {4}]
  %s24 = inlined_call_operand.hbm [shape: f32[8,128], index: 24, kind: output, shape index: {5}]
  %25 = xla_tuple %s19, %s20, %s21, %s22, %s23, %s24
  %s26 = sld [smem:[#allocation0]]
  $region166: #{tpu_custom_call.1} parent=0
    _
  %s28 = ssub.s32 1, %s26
  %s29 = scalar_select 0, %s28, %s26
  %30 = sst [smem:[#allocation2]] %s2
  $region1: #{tpu_custom_call.1} parent=0
    #allocation3 [shape = 'u8[16384]{0}', space=vmem, size = 0x4000, scoped, tag = 'input window, operand 0, single buffered']
    #allocation4 [shape = 's32[1]{0}', space=sflag, size = 0x4, scoped, tag = 'scoped memory for tpu_custom_call.1']
    #allocation5 [shape = 's32[1]{0}', space=sflag, size = 0x4, scoped, tag = 'scoped memory for tpu_custom_call.1']
    #allocation6 [shape = 's32[1]{0}', space=sflag, size = 0x4, scoped, tag = 'scoped memory for tpu_custom_call.1']
    #allocation7 [shape = 'u8[512]{0}', space=smem, size = 0x200, scoped, tag = 'input window, operand 1, single buffered']
    #allocation8 [shape = 'u8[65536]{0}', space=vmem, size = 0x10000, scoped, tag = 'input window, operand 3, single buffered']
    #allocation9 [shape = 's32[1]{0}', space=sflag, size = 0x4, scoped, tag = 'scoped memory for tpu_custom_call.1']
    #allocation10 [shape = 'u8[65536]{0}', space=vmem, size = 0x10000, scoped, tag = 'input window, operand 5, single buffered']
    #allocation11 [shape = 'u8[65536]{0}', space=vmem, size = 0x10000, scoped, tag = 'input window, operand 7, single buffered']
    #allocation12 [shape = 's32[1]{0}', space=sflag, size = 0x4, scoped, tag = 'scoped memory for tpu_custom_call.1']
    #allocation13 [shape = 'u8[65536]{0}', space=vmem, size = 0x10000, scoped, tag = 'input window, operand 9, single buffered']
    #allocation14 [shape = 'u8[65536]{0}', space=vmem, size = 0x10000, scoped, tag = 'input window, operand 11, single buffered']
    #allocation15 [shape = 's32[1]{0}', space=sflag, size = 0x4, scoped, tag = 'scoped memory for tpu_custom_call.1']
    #allocation16 [shape = 'u8[65536]{0}', space=vmem, size = 0x10000, scoped, tag = 'input window, operand 13, single buffered']
    #allocation17 [shape = 'u8[65536]{0}', space=vmem, size = 0x10000, scoped, tag = 'input window, operand 15, single buffered']
    #allocation18 [shape = 's32[1]{0}', space=sflag, size = 0x4, scoped, tag = 'scoped memory for tpu_custom_call.1']
    #allocation19 [shape = 'u8[65536]{0}', space=vmem, size = 0x10000, scoped, tag = 'input window, operand 17, single buffered']
    #allocation20 [shape = 'u8[4096]{0}', space=vmem, size = 0x1000, scoped, tag = 'output window, operand 0, single buffered']
    #allocation21 [shape = 'u8[4096]{0}', space=vmem, size = 0x1000, scoped, tag = 'output window, operand 1, single buffered']
    #allocation22 [shape = 's32[1]{0}', space=sflag, size = 0x4, scoped, tag = 'scoped memory for tpu_custom_call.1']
    #allocation23 [shape = 'u8[4096]{0}', space=vmem, size = 0x1000, scoped, tag = 'output window, operand 2, single buffered']
    #allocation24 [shape = 'u8[4096]{0}', space=vmem, size = 0x1000, scoped, tag = 'output window, operand 3, single buffered']
    #allocation25 [shape = 's32[1]{0}', space=sflag, size = 0x4, scoped, tag = 'scoped memory for tpu_custom_call.1']
    #allocation26 [shape = 'u8[4096]{0}', space=vmem, size = 0x1000, scoped, tag = 'output window, operand 4, single buffered']
    #allocation27 [shape = 'u8[4096]{0}', space=vmem, size = 0x1000, scoped, tag = 'output window, operand 5, single buffered']
    #allocation28 [shape = 's32[1]{0}', space=sflag, size = 0x4, scoped, tag = 'scoped memory for tpu_custom_call.1']
    %31 = vsyncpa [#allocation4], 0
    %32 = vsyncpa [#allocation6], 0
    %33 = vsyncpa [#allocation9], 0
    %34 = vsyncpa [#allocation12], 0
    %35 = vsyncpa [#allocation15], 0
    %36 = vsyncpa [#allocation18], 0
    %37 = vsyncpa [#allocation5], 0
    %38 = vsyncpa [#allocation22], 0
    %39 = vsyncpa [#allocation25], 0
    %40 = vsyncpa [#allocation28], 0
    // Predicated region
    $region2: #{tpu_custom_call.1} parent=1 // pred_check
      _
    $region3: #{tpu_custom_call.1} parent=1 // pred_check_branch
      %42 = sbr.rel (0) target = $region5
    $region4: #{tpu_custom_call.1} parent=1 // pred_region
      %44 = vsyncadd [#allocation4], 0
      %s45 = sshll.u32 %s0, 4
      %s46 = int_to_ptr.hbm [resolvable:$true] %s45
      %s47 = sshll.u32 [#allocation3], 4
      %s48 = int_to_ptr.vmem [resolvable:$true] %s47
      %53 = dma.hbm_to_vmem [thread:$0]  %s46, 512, %s48, [#allocation4], 64, 64, 4
    $region5: #{tpu_custom_call.1} parent=1 // pred_fallthru
      _
    // Predicated region
    $region6: #{tpu_custom_call.1} parent=1 // pred_check
      _
    $region7: #{tpu_custom_call.1} parent=1 // pred_check_branch
      %55 = sbr.rel (0) target = $region9
    $region8: #{tpu_custom_call.1} parent=1 // pred_region
      %57 = vsyncadd [#allocation6], 0
      %s59 = sshll.u32 %s1, 4
      %s60 = int_to_ptr.vmem [resolvable:$true] %s59
      %62 = dma.vmem_to_smem %s60, 16, [#allocation7], [#allocation6]
    $region9: #{tpu_custom_call.1} parent=1 // pred_fallthru
      _
    // Predicated region
    $region10: #{tpu_custom_call.1} parent=1 // pred_check
      _
    $region11: #{tpu_custom_call.1} parent=1 // pred_check_branch
      %64 = sbr.rel (0) target = $region13
    $region12: #{tpu_custom_call.1} parent=1 // pred_region
      _
    $region13: #{tpu_custom_call.1} parent=1 // pred_fallthru
      _
    // Predicated region
    $region14: #{tpu_custom_call.1} parent=1 // pred_check
      _
    $region15: #{tpu_custom_call.1} parent=1 // pred_check_branch
      %66 = sbr.rel (0) target = $region17
    $region16: #{tpu_custom_call.1} parent=1 // pred_region
      %68 = vsyncadd [#allocation9], 0
      %s69 = sshll.u32 %s3, 4
      %s70 = int_to_ptr.hbm [resolvable:$true] %s69
      %s71 = sshll.u32 [#allocation8], 4
      %s72 = int_to_ptr.vmem [resolvable:$true] %s71
      %77 = dma.hbm_to_vmem [thread:$0]  %s70, 2048, %s72, [#allocation9], 128, 128, 8
    $region17: #{tpu_custom_call.1} parent=1 // pred_fallthru
      _
    // Predicated region
    $region18: #{tpu_custom_call.1} parent=1 // pred_check
      _
    $region19: #{tpu_custom_call.1} parent=1 // pred_check_branch
      %79 = sbr.rel (0) target = $region21
    $region20: #{tpu_custom_call.1} parent=1 // pred_region
      _
    $region21: #{tpu_custom_call.1} parent=1 // pred_fallthru
      _
    // Predicated region
    $region22: #{tpu_custom_call.1} parent=1 // pred_check
      _
    $region23: #{tpu_custom_call.1} parent=1 // pred_check_branch
      %81 = sbr.rel (0) target = $region25
    $region24: #{tpu_custom_call.1} parent=1 // pred_region
      %83 = vsyncadd [#allocation9], 0
      %s84 = sshll.u32 %s5, 4
      %s85 = int_to_ptr.hbm [resolvable:$true] %s84
      %s86 = sshll.u32 [#allocation10], 4
      %s87 = int_to_ptr.vmem [resolvable:$true] %s86
      %92 = dma.hbm_to_vmem [thread:$0]  %s85, 2048, %s87, [#allocation9], 128, 128, 8
    $region25: #{tpu_custom_call.1} parent=1 // pred_fallthru
      _
    // Predicated region
    $region26: #{tpu_custom_call.1} parent=1 // pred_check
      _
    $region27: #{tpu_custom_call.1} parent=1 // pred_check_branch
      %94 = sbr.rel (0) target = $region29
    $region28: #{tpu_custom_call.1} parent=1 // pred_region
      _
    $region29: #{tpu_custom_call.1} parent=1 // pred_fallthru
      _
    // Predicated region
    $region30: #{tpu_custom_call.1} parent=1 // pred_check
      _
    $region31: #{tpu_custom_call.1} parent=1 // pred_check_branch
      %96 = sbr.rel (0) target = $region33
    $region32: #{tpu_custom_call.1} parent=1 // pred_region
      %98 = vsyncadd [#allocation12], 0
      %s99 = sshll.u32 %s7, 4
      %s100 = int_to_ptr.hbm [resolvable:$true] %s99
      %s101 = sshll.u32 [#allocation11], 4
      %s102 = int_to_ptr.vmem [resolvable:$true] %s101
      %107 = dma.hbm_to_vmem [thread:$0]  %s100, 2048, %s102, [#allocation12], 128, 128, 8
    $region33: #{tpu_custom_call.1} parent=1 // pred_fallthru
      _
    // Predicated region
    $region34: #{tpu_custom_call.1} parent=1 // pred_check
      _
    $region35: #{tpu_custom_call.1} parent=1 // pred_check_branch
      %109 = sbr.rel (0) target = $region37
    $region36: #{tpu_custom_call.1} parent=1 // pred_region
      _
    $region37: #{tpu_custom_call.1} parent=1 // pred_fallthru
      _
    // Predicated region
    $region38: #{tpu_custom_call.1} parent=1 // pred_check
      _
    $region39: #{tpu_custom_call.1} parent=1 // pred_check_branch
      %111 = sbr.rel (0) target = $region41
    $region40: #{tpu_custom_call.1} parent=1 // pred_region
      %113 = vsyncadd [#allocation12], 0
      %s114 = sshll.u32 %s9, 4
      %s115 = int_to_ptr.hbm [resolvable:$true] %s114
      %s116 = sshll.u32 [#allocation13], 4
      %s117 = int_to_ptr.vmem [resolvable:$true] %s116
      %122 = dma.hbm_to_vmem [thread:$0]  %s115, 2048, %s117, [#allocation12], 128, 128, 8
    $region41: #{tpu_custom_call.1} parent=1 // pred_fallthru
      _
    // Predicated region
    $region42: #{tpu_custom_call.1} parent=1 // pred_check
      _
    $region43: #{tpu_custom_call.1} parent=1 // pred_check_branch
      %124 = sbr.rel (0) target = $region45
    $region44: #{tpu_custom_call.1} parent=1 // pred_region
      _
    $region45: #{tpu_custom_call.1} parent=1 // pred_fallthru
      _
    // Predicated region
    $region46: #{tpu_custom_call.1} parent=1 // pred_check
      _
    $region47: #{tpu_custom_call.1} parent=1 // pred_check_branch
      %126 = sbr.rel (0) target = $region49
    $region48: #{tpu_custom_call.1} parent=1 // pred_region
      %128 = vsyncadd [#allocation15], 0
      %s129 = sshll.u32 %s11, 4
      %s130 = int_to_ptr.hbm [resolvable:$true] %s129
      %s131 = sshll.u32 [#allocation14], 4
      %s132 = int_to_ptr.vmem [resolvable:$true] %s131
      %137 = dma.hbm_to_vmem [thread:$0]  %s130, 2048, %s132, [#allocation15], 128, 128, 8
    $region49: #{tpu_custom_call.1} parent=1 // pred_fallthru
      _
    // Predicated region
    $region50: #{tpu_custom_call.1} parent=1 // pred_check
      _
    $region51: #{tpu_custom_call.1} parent=1 // pred_check_branch
      %139 = sbr.rel (0) target = $region53
    $region52: #{tpu_custom_call.1} parent=1 // pred_region
      _
    $region53: #{tpu_custom_call.1} parent=1 // pred_fallthru
      _
    // Predicated region
    $region54: #{tpu_custom_call.1} parent=1 // pred_check
      _
    $region55: #{tpu_custom_call.1} parent=1 // pred_check_branch
      %141 = sbr.rel (0) target = $region57
    $region56: #{tpu_custom_call.1} parent=1 // pred_region
      %143 = vsyncadd [#allocation15], 0
      %s144 = sshll.u32 %s13, 4
      %s145 = int_to_ptr.hbm [resolvable:$true] %s144
      %s146 = sshll.u32 [#allocation16], 4
      %s147 = int_to_ptr.vmem [resolvable:$true] %s146
      %152 = dma.hbm_to_vmem [thread:$0]  %s145, 2048, %s147, [#allocation15], 128, 128, 8
    $region57: #{tpu_custom_call.1} parent=1 // pred_fallthru
      _
    // Predicated region
    $region58: #{tpu_custom_call.1} parent=1 // pred_check
      _
    $region59: #{tpu_custom_call.1} parent=1 // pred_check_branch
      %154 = sbr.rel (0) target = $region61
    $region60: #{tpu_custom_call.1} parent=1 // pred_region
      _
    $region61: #{tpu_custom_call.1} parent=1 // pred_fallthru
      _
    // Predicated region
    $region62: #{tpu_custom_call.1} parent=1 // pred_check
      _
    $region63: #{tpu_custom_call.1} parent=1 // pred_check_branch
      %156 = sbr.rel (0) target = $region65
    $region64: #{tpu_custom_call.1} parent=1 // pred_region
      %158 = vsyncadd [#allocation18], 0
      %s159 = sshll.u32 %s15, 4
      %s160 = int_to_ptr.hbm [resolvable:$true] %s159
      %s161 = sshll.u32 [#allocation17], 4
      %s162 = int_to_ptr.vmem [resolvable:$true] %s161
      %167 = dma.hbm_to_vmem [thread:$0]  %s160, 2048, %s162, [#allocation18], 128, 128, 8
    $region65: #{tpu_custom_call.1} parent=1 // pred_fallthru
      _
    // Predicated region
    $region66: #{tpu_custom_call.1} parent=1 // pred_check
      _
    $region67: #{tpu_custom_call.1} parent=1 // pred_check_branch
      %169 = sbr.rel (0) target = $region69
    $region68: #{tpu_custom_call.1} parent=1 // pred_region
      _
    $region69: #{tpu_custom_call.1} parent=1 // pred_fallthru
      _
    // Predicated region
    $region70: #{tpu_custom_call.1} parent=1 // pred_check
      _
    $region71: #{tpu_custom_call.1} parent=1 // pred_check_branch
      %171 = sbr.rel (0) target = $region73
    $region72: #{tpu_custom_call.1} parent=1 // pred_region
      %173 = vsyncadd [#allocation18], 0
      %s174 = sshll.u32 %s17, 4
      %s175 = int_to_ptr.hbm [resolvable:$true] %s174
      %s176 = sshll.u32 [#allocation19], 4
      %s177 = int_to_ptr.vmem [resolvable:$true] %s176
      %182 = dma.hbm_to_vmem [thread:$0]  %s175, 2048, %s177, [#allocation18], 128, 128, 8
    $region73: #{tpu_custom_call.1} parent=1 // pred_fallthru
      _
    // Predicated region
    $region74: #{tpu_custom_call.1} parent=1 // pred_check
      _
    $region75: #{tpu_custom_call.1} parent=1 // pred_check_branch
      %184 = sbr.rel (0) target = $region77
    $region76: #{tpu_custom_call.1} parent=1 // pred_region
      _
    $region77: #{tpu_custom_call.1} parent=1 // pred_fallthru
      _
    // Predicated region
    $region78: #{tpu_custom_call.1} parent=1 // pred_check
      _
    $region79: #{tpu_custom_call.1} parent=1 // pred_check_branch
      %186 = sbr.rel (0) target = $region81
    $region80: #{tpu_custom_call.1} parent=1 // pred_region
      %188 = dma.done [#allocation4], 512
    $region81: #{tpu_custom_call.1} parent=1 // pred_fallthru
      _
    // Predicated region
    $region82: #{tpu_custom_call.1} parent=1 // pred_check
      _
    $region83: #{tpu_custom_call.1} parent=1 // pred_check_branch
      %190 = sbr.rel (0) target = $region85
    $region84: #{tpu_custom_call.1} parent=1 // pred_region
      %192 = dma.done [#allocation6], 16
    $region85: #{tpu_custom_call.1} parent=1 // pred_fallthru
      _
    // Predicated region
    $region86: #{tpu_custom_call.1} parent=1 // pred_check
      _
    $region87: #{tpu_custom_call.1} parent=1 // pred_check_branch
      %194 = sbr.rel (0) target = $region89
    $region88: #{tpu_custom_call.1} parent=1 // pred_region
      %196 = dma.done [#allocation9], 2048
    $region89: #{tpu_custom_call.1} parent=1 // pred_fallthru
      _
    // Predicated region
    $region90: #{tpu_custom_call.1} parent=1 // pred_check
      _
    $region91: #{tpu_custom_call.1} parent=1 // pred_check_branch
      %198 = sbr.rel (0) target = $region93
    $region92: #{tpu_custom_call.1} parent=1 // pred_region
      %200 = dma.done [#allocation9], 2048
    $region93: #{tpu_custom_call.1} parent=1 // pred_fallthru
      _
    // Predicated region
    $region94: #{tpu_custom_call.1} parent=1 // pred_check
      _
    $region95: #{tpu_custom_call.1} parent=1 // pred_check_branch
      %202 = sbr.rel (0) target = $region97
    $region96: #{tpu_custom_call.1} parent=1 // pred_region
      %204 = dma.done [#allocation12], 2048
    $region97: #{tpu_custom_call.1} parent=1 // pred_fallthru
      _
    // Predicated region
    $region98: #{tpu_custom_call.1} parent=1 // pred_check
      _
    $region99: #{tpu_custom_call.1} parent=1 // pred_check_branch
      %206 = sbr.rel (0) target = $region101
    $region100: #{tpu_custom_call.1} parent=1 // pred_region
      %208 = dma.done [#allocation12], 2048
    $region101: #{tpu_custom_call.1} parent=1 // pred_fallthru
      _
    // Predicated region
    $region102: #{tpu_custom_call.1} parent=1 // pred_check
      _
    $region103: #{tpu_custom_call.1} parent=1 // pred_check_branch
      %210 = sbr.rel (0) target = $region105
    $region104: #{tpu_custom_call.1} parent=1 // pred_region
      %212 = dma.done [#allocation15], 2048
    $region105: #{tpu_custom_call.1} parent=1 // pred_fallthru
      _
    // Predicated region
    $region106: #{tpu_custom_call.1} parent=1 // pred_check
      _
    $region107: #{tpu_custom_call.1} parent=1 // pred_check_branch
      %214 = sbr.rel (0) target = $region109
    $region108: #{tpu_custom_call.1} parent=1 // pred_region
      %216 = dma.done [#allocation15], 2048
    $region109: #{tpu_custom_call.1} parent=1 // pred_fallthru
      _
    // Predicated region
    $region110: #{tpu_custom_call.1} parent=1 // pred_check
      _
    $region111: #{tpu_custom_call.1} parent=1 // pred_check_branch
      %218 = sbr.rel (0) target = $region113
    $region112: #{tpu_custom_call.1} parent=1 // pred_region
      %220 = dma.done [#allocation18], 2048
    $region113: #{tpu_custom_call.1} parent=1 // pred_fallthru
      _
    // Predicated region
    $region114: #{tpu_custom_call.1} parent=1 // pred_check
      _
    $region115: #{tpu_custom_call.1} parent=1 // pred_check_branch
      %222 = sbr.rel (0) target = $region117
    $region116: #{tpu_custom_call.1} parent=1 // pred_region
      %224 = dma.done [#allocation18], 2048
    $region117: #{tpu_custom_call.1} parent=1 // pred_fallthru
      _
    %225 = sfence
    %v226 = vld [vmem:[#allocation3] sm:$0xf]
    %v227 = vld [vmem:[#allocation3 + $0x4] sm:$0xf]
    %v228 = vld [vmem:[#allocation3 + $0x8] sm:$0xf]
    %v229 = vld [vmem:[#allocation3 + $0xc] sm:$0xf]
    %v230 = vld [vmem:[#allocation3 + $0x10] sm:$0xf]
    %v231 = vld [vmem:[#allocation3 + $0x14] sm:$0xf]
    %v232 = vld [vmem:[#allocation3 + $0x18] sm:$0xf]
    %v233 = vld [vmem:[#allocation3 + $0x1c] sm:$0xf]
    %s234 = sld [smem:[#allocation7]]
    %v235 = vstv %s234
    %v236 = vmul.f32 %v226, %v235
    %v237 = vmul.f32 %v227, %v235
    %v238 = vmul.f32 %v228, %v235
    %v239 = vmul.f32 %v229, %v235
    %v240 = vmul.f32 %v230, %v235
    %v241 = vmul.f32 %v231, %v235
    %v242 = vmul.f32 %v232, %v235
    %v243 = vmul.f32 %v233, %v235
    %s244 = sld [smem:[#allocation7 + $0x1]]
    %v245 = vstv %s244
    %v246 = vmul.f32 %v226, %v245
    %v247 = vmul.f32 %v227, %v245
    %v248 = vmul.f32 %v228, %v245
    %v249 = vmul.f32 %v229, %v245
    %v250 = vmul.f32 %v230, %v245
    %v251 = vmul.f32 %v231, %v245
    %v252 = vmul.f32 %v232, %v245
    %v253 = vmul.f32 %v233, %v245
    %s254 = sld [smem:[#allocation7 + $0x2]]
    %v255 = vstv %s254
    %v256 = vmul.f32 %v226, %v255
    %v257 = vmul.f32 %v227, %v255
    %v258 = vmul.f32 %v228, %v255
    %v259 = vmul.f32 %v229, %v255
    %v260 = vmul.f32 %v230, %v255
    %v261 = vmul.f32 %v231, %v255
    %v262 = vmul.f32 %v232, %v255
    %v263 = vmul.f32 %v233, %v255
    %v272 = vrot.slane %v256, 2
    %v273 = vrot.slane %v257, 2
    %v274 = vrot.slane %v258, 2
    %v275 = vrot.slane %v259, 2
    %v276 = vrot.slane %v260, 2
    %v277 = vrot.slane %v261, 2
    %v278 = vrot.slane %v262, 2
    %v279 = vrot.slane %v263, 2
    %v288 = vadd.f32 %v236, %v272
    %v289 = vadd.f32 %v237, %v273
    %v290 = vadd.f32 %v238, %v274
    %v291 = vadd.f32 %v239, %v275
    %v292 = vadd.f32 %v240, %v276
    %v293 = vadd.f32 %v241, %v277
    %v294 = vadd.f32 %v242, %v278
    %v295 = vadd.f32 %v243, %v279
    %s296 = sld [smem:[#allocation7 + $0x3]]
    %v297 = vstv %s296
    %v298 = vmul.f32 %v226, %v297
    %v299 = vmul.f32 %v227, %v297
    %v300 = vmul.f32 %v228, %v297
    %v301 = vmul.f32 %v229, %v297
    %v302 = vmul.f32 %v230, %v297
    %v303 = vmul.f32 %v231, %v297
    %v304 = vmul.f32 %v232, %v297
    %v305 = vmul.f32 %v233, %v297
    %v314 = vrot.slane %v298, 2
    %v315 = vrot.slane %v299, 2
    %v316 = vrot.slane %v300, 2
    %v317 = vrot.slane %v301, 2
    %v318 = vrot.slane %v302, 2
    %v319 = vrot.slane %v303, 2
    %v320 = vrot.slane %v304, 2
    %v321 = vrot.slane %v305, 2
    %v330 = vadd.f32 %v246, %v314
    %v331 = vadd.f32 %v247, %v315
    %v332 = vadd.f32 %v248, %v316
    %v333 = vadd.f32 %v249, %v317
    %v334 = vadd.f32 %v250, %v318
    %v335 = vadd.f32 %v251, %v319
    %v336 = vadd.f32 %v252, %v320
    %v337 = vadd.f32 %v253, %v321
    %v346 = vrot.slane %v330, 1
    %v347 = vrot.slane %v331, 1
    %v348 = vrot.slane %v332, 1
    %v349 = vrot.slane %v333, 1
    %v350 = vrot.slane %v334, 1
    %v351 = vrot.slane %v335, 1
    %v352 = vrot.slane %v336, 1
    %v353 = vrot.slane %v337, 1
    %v362 = vadd.f32 %v288, %v346
    %v363 = vadd.f32 %v289, %v347
    %v364 = vadd.f32 %v290, %v348
    %v365 = vadd.f32 %v291, %v349
    %v366 = vadd.f32 %v292, %v350
    %v367 = vadd.f32 %v293, %v351
    %v368 = vadd.f32 %v294, %v352
    %v369 = vadd.f32 %v295, %v353
    %s370 = sld [smem:[#allocation2]]
    %v371 = vstv %s370
    %v372 = vadd.f32 %v362, %v371
    %v373 = vadd.f32 %v363, %v371
    %v374 = vadd.f32 %v364, %v371
    %v375 = vadd.f32 %v365, %v371
    %v376 = vadd.f32 %v366, %v371
    %v377 = vadd.f32 %v367, %v371
    %v378 = vadd.f32 %v368, %v371
    %v379 = vadd.f32 %v369, %v371
    %v388 = vrot.slane %v373, 7
    %vm389 = vcmask 1041409
    %v390 = vsel %vm389, %v388, %v372
    %v391 = vrot.slane %v374, 6
    %vm392 = vcmask 1042434
    %v393 = vsel %vm392, %v391, %v390
    %v394 = vrot.slane %v375, 5
    %vm395 = vcmask 1043459
    %v396 = vsel %vm395, %v394, %v393
    %v397 = vrot.slane %v376, 4
    %vm398 = vcmask 1044484
    %v399 = vsel %vm398, %v397, %v396
    %v400 = vrot.slane %v377, 3
    %vm401 = vcmask 1045509
    %v402 = vsel %vm401, %v400, %v399
    %v403 = vrot.slane %v378, 2
    %vm404 = vcmask 1046534
    %v405 = vsel %vm404, %v403, %v402
    %v406 = vrot.slane %v379, 1
    %vm407 = vcmask 1047559
    %v408 = vsel %vm407, %v406, %v405
    %410 = vst [vmem:[#allocation27] sm:$0xff] %v408
    %v411 = vld [vmem:[#allocation8] sm:$0xff]
    %v412 = vld [vmem:[#allocation8 + $0x8] sm:$0xff]
    %v413 = vld [vmem:[#allocation8 + $0x10] sm:$0xff]
    %v414 = vld [vmem:[#allocation8 + $0x18] sm:$0xff]
    %v415 = vld [vmem:[#allocation8 + $0x20] sm:$0xff]
    %v416 = vld [vmem:[#allocation8 + $0x28] sm:$0xff]
    %v417 = vld [vmem:[#allocation8 + $0x30] sm:$0xff]
    %v418 = vld [vmem:[#allocation8 + $0x38] sm:$0xff]
    %v419 = vld [vmem:[#allocation8 + $0x40] sm:$0xff]
    %v420 = vld [vmem:[#allocation8 + $0x48] sm:$0xff]
    %v421 = vld [vmem:[#allocation8 + $0x50] sm:$0xff]
    %v422 = vld [vmem:[#allocation8 + $0x58] sm:$0xff]
    %v423 = vld [vmem:[#allocation8 + $0x60] sm:$0xff]
    %v424 = vld [vmem:[#allocation8 + $0x68] sm:$0xff]
    %v425 = vld [vmem:[#allocation8 + $0x70] sm:$0xff]
    %v426 = vld [vmem:[#allocation8 + $0x78] sm:$0xff]
    %v427 = vld [vmem:[%s4] sm:$0x1]
    %v429 = vperm.slane %v427, 0
    %431 = vmatpush.msra.mxu0 %v426
    %432 = vmatpush.msra.mxu0 %v425
    %433 = vmatpush.msra.mxu0 %v424
    %434 = vmatpush.msra.mxu0 %v423
    %435 = vmatpush.msra.mxu0 %v422
    %436 = vmatpush.msra.mxu0 %v421
    %437 = vmatpush.msra.mxu0 %v420
    %438 = vmatpush.msra.mxu0 %v419
    %439 = vmatpush.msra.mxu0 %v418
    %440 = vmatpush.msra.mxu0 %v417
    %441 = vmatpush.msra.mxu0 %v416
    %442 = vmatpush.msra.mxu0 %v415
    %443 = vmatpush.msra.mxu0 %v414
    %444 = vmatpush.msra.mxu0 %v413
    %445 = vmatpush.msra.mxu0 %v412
    %446 = vmatpush.msra.mxu0 %v411
    %447 = vmatmul.f32.gmra.mxu0 %v408
    %v448 = vpop.f32.mrf.mxu0
    %v449 = vadd.f32 %v429, %v448
    %450 = vdwg.mxu0
    %v451 = vmax.f32 %v449, 0.0
    %452 = vst [vmem:[#allocation21] sm:$0xff] %v451
    %v453 = vld [vmem:[#allocation10] sm:$0xff]
    %v454 = vld [vmem:[#allocation10 + $0x8] sm:$0xff]
    %v455 = vld [vmem:[#allocation10 + $0x10] sm:$0xff]
    %v456 = vld [vmem:[#allocation10 + $0x18] sm:$0xff]
    %v457 = vld [vmem:[#allocation10 + $0x20] sm:$0xff]
    %v458 = vld [vmem:[#allocation10 + $0x28] sm:$0xff]
    %v459 = vld [vmem:[#allocation10 + $0x30] sm:$0xff]
    %v460 = vld [vmem:[#allocation10 + $0x38] sm:$0xff]
    %v461 = vld [vmem:[#allocation10 + $0x40] sm:$0xff]
    %v462 = vld [vmem:[#allocation10 + $0x48] sm:$0xff]
    %v463 = vld [vmem:[#allocation10 + $0x50] sm:$0xff]
    %v464 = vld [vmem:[#allocation10 + $0x58] sm:$0xff]
    %v465 = vld [vmem:[#allocation10 + $0x60] sm:$0xff]
    %v466 = vld [vmem:[#allocation10 + $0x68] sm:$0xff]
    %v467 = vld [vmem:[#allocation10 + $0x70] sm:$0xff]
    %v468 = vld [vmem:[#allocation10 + $0x78] sm:$0xff]
    %v469 = vld [vmem:[%s6] sm:$0x1]
    %v471 = vperm.slane %v469, 0
    %473 = vmatpush.msra.mxu0 %v468
    %474 = vmatpush.msra.mxu0 %v467
    %475 = vmatpush.msra.mxu0 %v466
    %476 = vmatpush.msra.mxu0 %v465
    %477 = vmatpush.msra.mxu0 %v464
    %478 = vmatpush.msra.mxu0 %v463
    %479 = vmatpush.msra.mxu0 %v462
    %480 = vmatpush.msra.mxu0 %v461
    %481 = vmatpush.msra.mxu0 %v460
    %482 = vmatpush.msra.mxu0 %v459
    %483 = vmatpush.msra.mxu0 %v458
    %484 = vmatpush.msra.mxu0 %v457
    %485 = vmatpush.msra.mxu0 %v456
    %486 = vmatpush.msra.mxu0 %v455
    %487 = vmatpush.msra.mxu0 %v454
    %488 = vmatpush.msra.mxu0 %v453
    %489 = vmatmul.f32.gmra.mxu0 %v451
    %v490 = vpop.f32.mrf.mxu0
    %v491 = vadd.f32 %v471, %v490
    %492 = vdwg.mxu0
    %v493 = vmax.f32 %v491, 0.0
    %494 = vst [vmem:[#allocation23] sm:$0xff] %v493
    %v495 = vld [vmem:[#allocation11] sm:$0xff]
    %v496 = vld [vmem:[#allocation11 + $0x8] sm:$0xff]
    %v497 = vld [vmem:[#allocation11 + $0x10] sm:$0xff]
    %v498 = vld [vmem:[#allocation11 + $0x18] sm:$0xff]
    %v499 = vld [vmem:[#allocation11 + $0x20] sm:$0xff]
    %v500 = vld [vmem:[#allocation11 + $0x28] sm:$0xff]
    %v501 = vld [vmem:[#allocation11 + $0x30] sm:$0xff]
    %v502 = vld [vmem:[#allocation11 + $0x38] sm:$0xff]
    %v503 = vld [vmem:[#allocation11 + $0x40] sm:$0xff]
    %v504 = vld [vmem:[#allocation11 + $0x48] sm:$0xff]
    %v505 = vld [vmem:[#allocation11 + $0x50] sm:$0xff]
    %v506 = vld [vmem:[#allocation11 + $0x58] sm:$0xff]
    %v507 = vld [vmem:[#allocation11 + $0x60] sm:$0xff]
    %v508 = vld [vmem:[#allocation11 + $0x68] sm:$0xff]
    %v509 = vld [vmem:[#allocation11 + $0x70] sm:$0xff]
    %v510 = vld [vmem:[#allocation11 + $0x78] sm:$0xff]
    %v511 = vld [vmem:[%s8] sm:$0x1]
    %v513 = vperm.slane %v511, 0
    %515 = vmatpush.msra.mxu0 %v510
    %516 = vmatpush.msra.mxu0 %v509
    %517 = vmatpush.msra.mxu0 %v508
    %518 = vmatpush.msra.mxu0 %v507
    %519 = vmatpush.msra.mxu0 %v506
    %520 = vmatpush.msra.mxu0 %v505
    %521 = vmatpush.msra.mxu0 %v504
    %522 = vmatpush.msra.mxu0 %v503
    %523 = vmatpush.msra.mxu0 %v502
    %524 = vmatpush.msra.mxu0 %v501
    %525 = vmatpush.msra.mxu0 %v500
    %526 = vmatpush.msra.mxu0 %v499
    %527 = vmatpush.msra.mxu0 %v498
    %528 = vmatpush.msra.mxu0 %v497
    %529 = vmatpush.msra.mxu0 %v496
    %530 = vmatpush.msra.mxu0 %v495
    %531 = vmatmul.f32.gmra.mxu0 %v493
    %v532 = vpop.f32.mrf.mxu0
    %v533 = vadd.f32 %v513, %v532
    %534 = vdwg.mxu0
    %v535 = vmax.f32 %v533, 0.0
    %536 = vst [vmem:[#allocation24] sm:$0xff] %v535
    %v537 = vld [vmem:[#allocation13] sm:$0xff]
    %v538 = vld [vmem:[#allocation13 + $0x8] sm:$0xff]
    %v539 = vld [vmem:[#allocation13 + $0x10] sm:$0xff]
    %v540 = vld [vmem:[#allocation13 + $0x18] sm:$0xff]
    %v541 = vld [vmem:[#allocation13 + $0x20] sm:$0xff]
    %v542 = vld [vmem:[#allocation13 + $0x28] sm:$0xff]
    %v543 = vld [vmem:[#allocation13 + $0x30] sm:$0xff]
    %v544 = vld [vmem:[#allocation13 + $0x38] sm:$0xff]
    %v545 = vld [vmem:[#allocation13 + $0x40] sm:$0xff]
    %v546 = vld [vmem:[#allocation13 + $0x48] sm:$0xff]
    %v547 = vld [vmem:[#allocation13 + $0x50] sm:$0xff]
    %v548 = vld [vmem:[#allocation13 + $0x58] sm:$0xff]
    %v549 = vld [vmem:[#allocation13 + $0x60] sm:$0xff]
    %v550 = vld [vmem:[#allocation13 + $0x68] sm:$0xff]
    %v551 = vld [vmem:[#allocation13 + $0x70] sm:$0xff]
    %v552 = vld [vmem:[#allocation13 + $0x78] sm:$0xff]
    %v553 = vld [vmem:[%s10] sm:$0x1]
    %v555 = vperm.slane %v553, 0
    %557 = vmatpush.msra.mxu0 %v552
    %558 = vmatpush.msra.mxu0 %v551
    %559 = vmatpush.msra.mxu0 %v550
    %560 = vmatpush.msra.mxu0 %v549
    %561 = vmatpush.msra.mxu0 %v548
    %562 = vmatpush.msra.mxu0 %v547
    %563 = vmatpush.msra.mxu0 %v546
    %564 = vmatpush.msra.mxu0 %v545
    %565 = vmatpush.msra.mxu0 %v544
    %566 = vmatpush.msra.mxu0 %v543
    %567 = vmatpush.msra.mxu0 %v542
    %568 = vmatpush.msra.mxu0 %v541
    %569 = vmatpush.msra.mxu0 %v540
    %570 = vmatpush.msra.mxu0 %v539
    %571 = vmatpush.msra.mxu0 %v538
    %572 = vmatpush.msra.mxu0 %v537
    %573 = vmatmul.f32.gmra.mxu0 %v535
    %v574 = vpop.f32.mrf.mxu0
    %v575 = vadd.f32 %v555, %v574
    %576 = vdwg.mxu0
    %577 = vst [vmem:[#allocation26] sm:$0xff] %v575
    %v578 = vld [vmem:[#allocation14] sm:$0xff]
    %v579 = vld [vmem:[#allocation14 + $0x8] sm:$0xff]
    %v580 = vld [vmem:[#allocation14 + $0x10] sm:$0xff]
    %v581 = vld [vmem:[#allocation14 + $0x18] sm:$0xff]
    %v582 = vld [vmem:[#allocation14 + $0x20] sm:$0xff]
    %v583 = vld [vmem:[#allocation14 + $0x28] sm:$0xff]
    %v584 = vld [vmem:[#allocation14 + $0x30] sm:$0xff]
    %v585 = vld [vmem:[#allocation14 + $0x38] sm:$0xff]
    %v586 = vld [vmem:[#allocation14 + $0x40] sm:$0xff]
    %v587 = vld [vmem:[#allocation14 + $0x48] sm:$0xff]
    %v588 = vld [vmem:[#allocation14 + $0x50] sm:$0xff]
    %v589 = vld [vmem:[#allocation14 + $0x58] sm:$0xff]
    %v590 = vld [vmem:[#allocation14 + $0x60] sm:$0xff]
    %v591 = vld [vmem:[#allocation14 + $0x68] sm:$0xff]
    %v592 = vld [vmem:[#allocation14 + $0x70] sm:$0xff]
    %v593 = vld [vmem:[#allocation14 + $0x78] sm:$0xff]
    %v594 = vld [vmem:[%s12] sm:$0x1]
    %v596 = vperm.slane %v594, 0
    %598 = vmatpush.msra.mxu0 %v593
    %599 = vmatpush.msra.mxu0 %v592
    %600 = vmatpush.msra.mxu0 %v591
    %601 = vmatpush.msra.mxu0 %v590
    %602 = vmatpush.msra.mxu0 %v589
    %603 = vmatpush.msra.mxu0 %v588
    %604 = vmatpush.msra.mxu0 %v587
    %605 = vmatpush.msra.mxu0 %v586
    %606 = vmatpush.msra.mxu0 %v585
    %607 = vmatpush.msra.mxu0 %v584
    %608 = vmatpush.msra.mxu0 %v583
    %609 = vmatpush.msra.mxu0 %v582
    %610 = vmatpush.msra.mxu0 %v581
    %611 = vmatpush.msra.mxu0 %v580
    %612 = vmatpush.msra.mxu0 %v579
    %613 = vmatpush.msra.mxu0 %v578
    %614 = vmatmul.f32.gmra.mxu0 %v575
    %v615 = vpop.f32.mrf.mxu0
    %v616 = vadd.f32 %v596, %v615
    %617 = vdwg.mxu0
    %v618 = vmax.f32 %v616, 0.0
    %v619 = vld [vmem:[#allocation16] sm:$0xff]
    %v620 = vld [vmem:[#allocation16 + $0x8] sm:$0xff]
    %v621 = vld [vmem:[#allocation16 + $0x10] sm:$0xff]
    %v622 = vld [vmem:[#allocation16 + $0x18] sm:$0xff]
    %v623 = vld [vmem:[#allocation16 + $0x20] sm:$0xff]
    %v624 = vld [vmem:[#allocation16 + $0x28] sm:$0xff]
    %v625 = vld [vmem:[#allocation16 + $0x30] sm:$0xff]
    %v626 = vld [vmem:[#allocation16 + $0x38] sm:$0xff]
    %v627 = vld [vmem:[#allocation16 + $0x40] sm:$0xff]
    %v628 = vld [vmem:[#allocation16 + $0x48] sm:$0xff]
    %v629 = vld [vmem:[#allocation16 + $0x50] sm:$0xff]
    %v630 = vld [vmem:[#allocation16 + $0x58] sm:$0xff]
    %v631 = vld [vmem:[#allocation16 + $0x60] sm:$0xff]
    %v632 = vld [vmem:[#allocation16 + $0x68] sm:$0xff]
    %v633 = vld [vmem:[#allocation16 + $0x70] sm:$0xff]
    %v634 = vld [vmem:[#allocation16 + $0x78] sm:$0xff]
    %v635 = vld [vmem:[%s14] sm:$0x1]
    %v637 = vperm.slane %v635, 0
    %639 = vmatpush.msra.mxu0 %v634
    %640 = vmatpush.msra.mxu0 %v633
    %641 = vmatpush.msra.mxu0 %v632
    %642 = vmatpush.msra.mxu0 %v631
    %643 = vmatpush.msra.mxu0 %v630
    %644 = vmatpush.msra.mxu0 %v629
    %645 = vmatpush.msra.mxu0 %v628
    %646 = vmatpush.msra.mxu0 %v627
    %647 = vmatpush.msra.mxu0 %v626
    %648 = vmatpush.msra.mxu0 %v625
    %649 = vmatpush.msra.mxu0 %v624
    %650 = vmatpush.msra.mxu0 %v623
    %651 = vmatpush.msra.mxu0 %v622
    %652 = vmatpush.msra.mxu0 %v621
    %653 = vmatpush.msra.mxu0 %v620
    %654 = vmatpush.msra.mxu0 %v619
    %655 = vmatmul.f32.gmra.mxu0 %v618
    %v656 = vpop.f32.mrf.mxu0
    %v657 = vadd.f32 %v637, %v656
    %658 = vdwg.mxu0
    %v659 = vmax.f32 %v657, 0.0
    %v660 = vld [vmem:[#allocation17] sm:$0xff]
    %v661 = vld [vmem:[#allocation17 + $0x8] sm:$0xff]
    %v662 = vld [vmem:[#allocation17 + $0x10] sm:$0xff]
    %v663 = vld [vmem:[#allocation17 + $0x18] sm:$0xff]
    %v664 = vld [vmem:[#allocation17 + $0x20] sm:$0xff]
    %v665 = vld [vmem:[#allocation17 + $0x28] sm:$0xff]
    %v666 = vld [vmem:[#allocation17 + $0x30] sm:$0xff]
    %v667 = vld [vmem:[#allocation17 + $0x38] sm:$0xff]
    %v668 = vld [vmem:[#allocation17 + $0x40] sm:$0xff]
    %v669 = vld [vmem:[#allocation17 + $0x48] sm:$0xff]
    %v670 = vld [vmem:[#allocation17 + $0x50] sm:$0xff]
    %v671 = vld [vmem:[#allocation17 + $0x58] sm:$0xff]
    %v672 = vld [vmem:[#allocation17 + $0x60] sm:$0xff]
    %v673 = vld [vmem:[#allocation17 + $0x68] sm:$0xff]
    %v674 = vld [vmem:[#allocation17 + $0x70] sm:$0xff]
    %v675 = vld [vmem:[#allocation17 + $0x78] sm:$0xff]
    %v676 = vld [vmem:[%s16] sm:$0x1]
    %v678 = vperm.slane %v676, 0
    %680 = vmatpush.msra.mxu0 %v675
    %681 = vmatpush.msra.mxu0 %v674
    %682 = vmatpush.msra.mxu0 %v673
    %683 = vmatpush.msra.mxu0 %v672
    %684 = vmatpush.msra.mxu0 %v671
    %685 = vmatpush.msra.mxu0 %v670
    %686 = vmatpush.msra.mxu0 %v669
    %687 = vmatpush.msra.mxu0 %v668
    %688 = vmatpush.msra.mxu0 %v667
    %689 = vmatpush.msra.mxu0 %v666
    %690 = vmatpush.msra.mxu0 %v665
    %691 = vmatpush.msra.mxu0 %v664
    %692 = vmatpush.msra.mxu0 %v663
    %693 = vmatpush.msra.mxu0 %v662
    %694 = vmatpush.msra.mxu0 %v661
    %695 = vmatpush.msra.mxu0 %v660
    %696 = vmatmul.f32.gmra.mxu0 %v659
    %v697 = vpop.f32.mrf.mxu0
    %v698 = vadd.f32 %v678, %v697
    %699 = vdwg.mxu0
    %v700 = vmax.f32 %v698, 0.0
    %v701 = vld [vmem:[#allocation19] sm:$0xff]
    %v702 = vld [vmem:[#allocation19 + $0x8] sm:$0xff]
    %v703 = vld [vmem:[#allocation19 + $0x10] sm:$0xff]
    %v704 = vld [vmem:[#allocation19 + $0x18] sm:$0xff]
    %v705 = vld [vmem:[#allocation19 + $0x20] sm:$0xff]
    %v706 = vld [vmem:[#allocation19 + $0x28] sm:$0xff]
    %v707 = vld [vmem:[#allocation19 + $0x30] sm:$0xff]
    %v708 = vld [vmem:[#allocation19 + $0x38] sm:$0xff]
    %v709 = vld [vmem:[#allocation19 + $0x40] sm:$0xff]
    %v710 = vld [vmem:[#allocation19 + $0x48] sm:$0xff]
    %v711 = vld [vmem:[#allocation19 + $0x50] sm:$0xff]
    %v712 = vld [vmem:[#allocation19 + $0x58] sm:$0xff]
    %v713 = vld [vmem:[#allocation19 + $0x60] sm:$0xff]
    %v714 = vld [vmem:[#allocation19 + $0x68] sm:$0xff]
    %v715 = vld [vmem:[#allocation19 + $0x70] sm:$0xff]
    %v716 = vld [vmem:[#allocation19 + $0x78] sm:$0xff]
    %v717 = vld [vmem:[%s18] sm:$0x1]
    %v719 = vperm.slane %v717, 0
    %721 = vmatpush.msra.mxu0 %v716
    %722 = vmatpush.msra.mxu0 %v715
    %723 = vmatpush.msra.mxu0 %v714
    %724 = vmatpush.msra.mxu0 %v713
    %725 = vmatpush.msra.mxu0 %v712
    %726 = vmatpush.msra.mxu0 %v711
    %727 = vmatpush.msra.mxu0 %v710
    %728 = vmatpush.msra.mxu0 %v709
    %729 = vmatpush.msra.mxu0 %v708
    %730 = vmatpush.msra.mxu0 %v707
    %731 = vmatpush.msra.mxu0 %v706
    %732 = vmatpush.msra.mxu0 %v705
    %733 = vmatpush.msra.mxu0 %v704
    %734 = vmatpush.msra.mxu0 %v703
    %735 = vmatpush.msra.mxu0 %v702
    %736 = vmatpush.msra.mxu0 %v701
    %737 = vmatmul.f32.gmra.mxu0 %v700
    %v738 = vpop.f32.mrf.mxu0
    %v739 = vadd.f32 %v719, %v738
    %740 = vdwg.mxu0
    %741 = vst [vmem:[#allocation20] sm:$0xff] %v739
    // Predicated region
    $region118: #{tpu_custom_call.1} parent=1 // pred_check
      _
    $region119: #{tpu_custom_call.1} parent=1 // pred_check_branch
      %743 = sbr.rel (0) target = $region121
    $region120: #{tpu_custom_call.1} parent=1 // pred_region
      %745 = vsyncadd [#allocation5], 0
      %s747 = sshll.u32 [#allocation20], 4
      %s748 = int_to_ptr.vmem [resolvable:$true] %s747
      %s749 = sshll.u32 %s19, 4
      %s750 = int_to_ptr.hbm [resolvable:$true] %s749
      %752 = dma.vmem_to_hbm [thread:$0]  %s748, 128, %s750, [#allocation5]
    $region121: #{tpu_custom_call.1} parent=1 // pred_fallthru
      _
    // Predicated region
    $region122: #{tpu_custom_call.1} parent=1 // pred_check
      _
    $region123: #{tpu_custom_call.1} parent=1 // pred_check_branch
      %754 = sbr.rel (0) target = $region125
    $region124: #{tpu_custom_call.1} parent=1 // pred_region
      %756 = vsyncadd [#allocation22], 0
      %s758 = sshll.u32 [#allocation21], 4
      %s759 = int_to_ptr.vmem [resolvable:$true] %s758
      %s760 = sshll.u32 %s20, 4
      %s761 = int_to_ptr.hbm [resolvable:$true] %s760
      %763 = dma.vmem_to_hbm [thread:$0]  %s759, 128, %s761, [#allocation22]
    $region125: #{tpu_custom_call.1} parent=1 // pred_fallthru
      _
    // Predicated region
    $region126: #{tpu_custom_call.1} parent=1 // pred_check
      _
    $region127: #{tpu_custom_call.1} parent=1 // pred_check_branch
      %765 = sbr.rel (0) target = $region129
    $region128: #{tpu_custom_call.1} parent=1 // pred_region
      %767 = vsyncadd [#allocation22], 0
      %s769 = sshll.u32 [#allocation23], 4
      %s770 = int_to_ptr.vmem [resolvable:$true] %s769
      %s771 = sshll.u32 %s21, 4
      %s772 = int_to_ptr.hbm [resolvable:$true] %s771
      %774 = dma.vmem_to_hbm [thread:$0]  %s770, 128, %s772, [#allocation22]
    $region129: #{tpu_custom_call.1} parent=1 // pred_fallthru
      _
    // Predicated region
    $region130: #{tpu_custom_call.1} parent=1 // pred_check
      _
    $region131: #{tpu_custom_call.1} parent=1 // pred_check_branch
      %776 = sbr.rel (0) target = $region133
    $region132: #{tpu_custom_call.1} parent=1 // pred_region
      %778 = vsyncadd [#allocation25], 0
      %s780 = sshll.u32 [#allocation24], 4
      %s781 = int_to_ptr.vmem [resolvable:$true] %s780
      %s782 = sshll.u32 %s22, 4
      %s783 = int_to_ptr.hbm [resolvable:$true] %s782
      %785 = dma.vmem_to_hbm [thread:$0]  %s781, 128, %s783, [#allocation25]
    $region133: #{tpu_custom_call.1} parent=1 // pred_fallthru
      _
    // Predicated region
    $region134: #{tpu_custom_call.1} parent=1 // pred_check
      _
    $region135: #{tpu_custom_call.1} parent=1 // pred_check_branch
      %787 = sbr.rel (0) target = $region137
    $region136: #{tpu_custom_call.1} parent=1 // pred_region
      %789 = vsyncadd [#allocation25], 0
      %s791 = sshll.u32 [#allocation26], 4
      %s792 = int_to_ptr.vmem [resolvable:$true] %s791
      %s793 = sshll.u32 %s23, 4
      %s794 = int_to_ptr.hbm [resolvable:$true] %s793
      %796 = dma.vmem_to_hbm [thread:$0]  %s792, 128, %s794, [#allocation25]
    $region137: #{tpu_custom_call.1} parent=1 // pred_fallthru
      _
    // Predicated region
    $region138: #{tpu_custom_call.1} parent=1 // pred_check
      _
    $region139: #{tpu_custom_call.1} parent=1 // pred_check_branch
      %798 = sbr.rel (0) target = $region141
    $region140: #{tpu_custom_call.1} parent=1 // pred_region
      %800 = vsyncadd [#allocation28], 0
      %s802 = sshll.u32 [#allocation27], 4
      %s803 = int_to_ptr.vmem [resolvable:$true] %s802
      %s804 = sshll.u32 %s24, 4
      %s805 = int_to_ptr.hbm [resolvable:$true] %s804
      %807 = dma.vmem_to_hbm [thread:$0]  %s803, 128, %s805, [#allocation28]
    $region141: #{tpu_custom_call.1} parent=1 // pred_fallthru
      _
    // Predicated region
    $region142: #{tpu_custom_call.1} parent=1 // pred_check
      _
    $region143: #{tpu_custom_call.1} parent=1 // pred_check_branch
      %809 = sbr.rel (0) target = $region145
    $region144: #{tpu_custom_call.1} parent=1 // pred_region
      %811 = dma.done [#allocation5], 128
    $region145: #{tpu_custom_call.1} parent=1 // pred_fallthru
      _
    // Predicated region
    $region146: #{tpu_custom_call.1} parent=1 // pred_check
      _
    $region147: #{tpu_custom_call.1} parent=1 // pred_check_branch
      %813 = sbr.rel (0) target = $region149
    $region148: #{tpu_custom_call.1} parent=1 // pred_region
      %815 = dma.done [#allocation22], 128
    $region149: #{tpu_custom_call.1} parent=1 // pred_fallthru
      _
    // Predicated region
    $region150: #{tpu_custom_call.1} parent=1 // pred_check
      _
    $region151: #{tpu_custom_call.1} parent=1 // pred_check_branch
      %817 = sbr.rel (0) target = $region153
    $region152: #{tpu_custom_call.1} parent=1 // pred_region
      %819 = dma.done [#allocation22], 128
    $region153: #{tpu_custom_call.1} parent=1 // pred_fallthru
      _
    // Predicated region
    $region154: #{tpu_custom_call.1} parent=1 // pred_check
      _
    $region155: #{tpu_custom_call.1} parent=1 // pred_check_branch
      %821 = sbr.rel (0) target = $region157
    $region156: #{tpu_custom_call.1} parent=1 // pred_region
      %823 = dma.done [#allocation25], 128
    $region157: #{tpu_custom_call.1} parent=1 // pred_fallthru
      _
    // Predicated region
    $region158: #{tpu_custom_call.1} parent=1 // pred_check
      _
    $region159: #{tpu_custom_call.1} parent=1 // pred_check_branch
      %825 = sbr.rel (0) target = $region161
    $region160: #{tpu_custom_call.1} parent=1 // pred_region
      %827 = dma.done [#allocation25], 128
    $region161: #{tpu_custom_call.1} parent=1 // pred_fallthru
      _
    // Predicated region
    $region162: #{tpu_custom_call.1} parent=1 // pred_check
      _
    $region163: #{tpu_custom_call.1} parent=1 // pred_check_branch
      %829 = sbr.rel (0) target = $region165
    $region164: #{tpu_custom_call.1} parent=1 // pred_region
      %831 = dma.done [#allocation28], 128
    $region165: #{tpu_custom_call.1} parent=1 // pred_fallthru
      _
    %832 = vsyncpa [#allocation4], 1
    %833 = vsyncpa [#allocation9], 1
    %834 = vsyncpa [#allocation12], 1
    %835 = vsyncpa [#allocation15], 1
    %836 = vsyncpa [#allocation18], 1
    %837 = vsyncpa [#allocation5], 1
    %838 = vsyncpa [#allocation22], 1
    %839 = vsyncpa [#allocation25], 1
    %840 = vsyncpa [#allocation28], 1
    %841 = vsyncpa [#allocation6], 1

// kernel: tpu_custom_call.1
$region0: #{tpu_custom_call.1}
  #allocation0 [shape = 'u32[]', space=smem, size = 0x4, offset = 0x4, fixed_abs, tag = 'smem constant byte address 0x4 - core index']
  #allocation1 [shape = 'u32[72,128]{1,0:T(1,128)}', space=vmem, size = 0x9000, scoped, tag = 'internal scratch']
  #allocation2 [shape = 'f32[1,1]{1,0:T(1,128)S(6)}', space=smem, size = 0x200, scoped, tag = 'scoped memory for tpu_custom_call.1']
  %s0 = inlined_call_operand.hbm [shape: f32[8,4,128], index: 0, kind: input, shape index: {}]
  %s1 = inlined_call_operand.vmem [shape: f32[1,4], index: 1, kind: input, shape index: {}]
  %s2 = inlined_call_operand.<no memory space> [shape: f32[1,1], index: 2, kind: input, shape index: {}]
  %s3 = inlined_call_operand.hbm [shape: f32[128,128], index: 3, kind: input, shape index: {}]
  %s4 = inlined_call_operand.vmem [shape: f32[1,128], index: 4, kind: input, shape index: {}]
  %s5 = inlined_call_operand.hbm [shape: f32[128,128], index: 5, kind: input, shape index: {}]
  %s6 = inlined_call_operand.vmem [shape: f32[1,128], index: 6, kind: input, shape index: {}]
  %s7 = inlined_call_operand.hbm [shape: f32[128,128], index: 7, kind: input, shape index: {}]
  %s8 = inlined_call_operand.vmem [shape: f32[1,128], index: 8, kind: input, shape index: {}]
  %s9 = inlined_call_operand.hbm [shape: f32[128,128], index: 9, kind: input, shape index: {}]
  %s10 = inlined_call_operand.vmem [shape: f32[1,128], index: 10, kind: input, shape index: {}]
  %s11 = inlined_call_operand.hbm [shape: f32[128,128], index: 11, kind: input, shape index: {}]
  %s12 = inlined_call_operand.vmem [shape: f32[1,128], index: 12, kind: input, shape index: {}]
  %s13 = inlined_call_operand.hbm [shape: f32[128,128], index: 13, kind: input, shape index: {}]
  %s14 = inlined_call_operand.vmem [shape: f32[1,128], index: 14, kind: input, shape index: {}]
  %s15 = inlined_call_operand.hbm [shape: f32[128,128], index: 15, kind: input, shape index: {}]
  %s16 = inlined_call_operand.vmem [shape: f32[1,128], index: 16, kind: input, shape index: {}]
  %s17 = inlined_call_operand.hbm [shape: f32[128,128], index: 17, kind: input, shape index: {}]
  %s18 = inlined_call_operand.vmem [shape: f32[1,128], index: 18, kind: input, shape index: {}]
  %s19 = inlined_call_operand.hbm [shape: f32[8,128], index: 19, kind: output, shape index: {0}]
  %s20 = inlined_call_operand.hbm [shape: f32[8,128], index: 20, kind: output, shape index: {1}]
  %s21 = inlined_call_operand.hbm [shape: f32[8,128], index: 21, kind: output, shape index: {2}]
  %s22 = inlined_call_operand.hbm [shape: f32[8,128], index: 22, kind: output, shape index: {3}]
  %s23 = inlined_call_operand.hbm [shape: f32[8,128], index: 23, kind: output, shape index: {4}]
  %s24 = inlined_call_operand.hbm [shape: f32[8,128], index: 24, kind: output, shape index: {5}]
  %25 = xla_tuple %s19, %s20, %s21, %s22, %s23, %s24
  %s26 = sld [smem:[#allocation0]]
  $region166: #{tpu_custom_call.1} parent=0
    _
  %s28 = ssub.s32 1, %s26
  %s29 = scalar_select 0, %s28, %s26
  %30 = sst [smem:[#allocation2]] %s2
  $region1: #{tpu_custom_call.1} parent=0
    #allocation3 [shape = 'u8[16384]{0}', space=vmem, size = 0x4000, scoped, tag = 'input window, operand 0, single buffered']
    #allocation4 [shape = 's32[1]{0}', space=sflag, size = 0x4, scoped, tag = 'scoped memory for tpu_custom_call.1']
    #allocation5 [shape = 's32[1]{0}', space=sflag, size = 0x4, scoped, tag = 'scoped memory for tpu_custom_call.1']
    #allocation6 [shape = 's32[1]{0}', space=sflag, size = 0x4, scoped, tag = 'scoped memory for tpu_custom_call.1']
    #allocation7 [shape = 'u8[512]{0}', space=smem, size = 0x200, scoped, tag = 'input window, operand 1, single buffered']
    #allocation8 [shape = 'u8[65536]{0}', space=vmem, size = 0x10000, scoped, tag = 'input window, operand 3, single buffered']
    #allocation9 [shape = 's32[1]{0}', space=sflag, size = 0x4, scoped, tag = 'scoped memory for tpu_custom_call.1']
    #allocation10 [shape = 'u8[65536]{0}', space=vmem, size = 0x10000, scoped, tag = 'input window, operand 5, single buffered']
    #allocation11 [shape = 'u8[65536]{0}', space=vmem, size = 0x10000, scoped, tag = 'input window, operand 7, single buffered']
    #allocation12 [shape = 's32[1]{0}', space=sflag, size = 0x4, scoped, tag = 'scoped memory for tpu_custom_call.1']
    #allocation13 [shape = 'u8[65536]{0}', space=vmem, size = 0x10000, scoped, tag = 'input window, operand 9, single buffered']
    #allocation14 [shape = 'u8[65536]{0}', space=vmem, size = 0x10000, scoped, tag = 'input window, operand 11, single buffered']
    #allocation15 [shape = 's32[1]{0}', space=sflag, size = 0x4, scoped, tag = 'scoped memory for tpu_custom_call.1']
    #allocation16 [shape = 'u8[65536]{0}', space=vmem, size = 0x10000, scoped, tag = 'input window, operand 13, single buffered']
    #allocation17 [shape = 'u8[65536]{0}', space=vmem, size = 0x10000, scoped, tag = 'input window, operand 15, single buffered']
    #allocation18 [shape = 's32[1]{0}', space=sflag, size = 0x4, scoped, tag = 'scoped memory for tpu_custom_call.1']
    #allocation19 [shape = 'u8[65536]{0}', space=vmem, size = 0x10000, scoped, tag = 'input window, operand 17, single buffered']
    #allocation20 [shape = 'u8[4096]{0}', space=vmem, size = 0x1000, scoped, tag = 'output window, operand 0, single buffered']
    #allocation21 [shape = 'u8[4096]{0}', space=vmem, size = 0x1000, scoped, tag = 'output window, operand 1, single buffered']
    #allocation22 [shape = 's32[1]{0}', space=sflag, size = 0x4, scoped, tag = 'scoped memory for tpu_custom_call.1']
    #allocation23 [shape = 'u8[4096]{0}', space=vmem, size = 0x1000, scoped, tag = 'output window, operand 2, single buffered']
    #allocation24 [shape = 'u8[4096]{0}', space=vmem, size = 0x1000, scoped, tag = 'output window, operand 3, single buffered']
    #allocation25 [shape = 's32[1]{0}', space=sflag, size = 0x4, scoped, tag = 'scoped memory for tpu_custom_call.1']
    #allocation26 [shape = 'u8[4096]{0}', space=vmem, size = 0x1000, scoped, tag = 'output window, operand 4, single buffered']
    #allocation27 [shape = 'u8[4096]{0}', space=vmem, size = 0x1000, scoped, tag = 'output window, operand 5, single buffered']
    #allocation28 [shape = 's32[1]{0}', space=sflag, size = 0x4, scoped, tag = 'scoped memory for tpu_custom_call.1']
    %31 = vsyncpa [#allocation4], 0
    %32 = vsyncpa [#allocation6], 0
    %33 = vsyncpa [#allocation9], 0
    %34 = vsyncpa [#allocation12], 0
    %35 = vsyncpa [#allocation15], 0
    %36 = vsyncpa [#allocation18], 0
    %37 = vsyncpa [#allocation5], 0
    %38 = vsyncpa [#allocation22], 0
    %39 = vsyncpa [#allocation25], 0
    %40 = vsyncpa [#allocation28], 0
    // Predicated region
    $region2: #{tpu_custom_call.1} parent=1 // pred_check
      _
    $region3: #{tpu_custom_call.1} parent=1 // pred_check_branch
      %42 = sbr.rel (0) target = $region5
    $region4: #{tpu_custom_call.1} parent=1 // pred_region
      %44 = vsyncadd [#allocation4], 0
      %s45 = sshll.u32 %s0, 4
      %s46 = int_to_ptr.hbm [resolvable:$true] %s45
      %s47 = sshll.u32 [#allocation3], 4
      %s48 = int_to_ptr.vmem [resolvable:$true] %s47
      %53 = dma.hbm_to_vmem [thread:$0]  %s46, 512, %s48, [#allocation4], 64, 64, 4
    $region5: #{tpu_custom_call.1} parent=1 // pred_fallthru
      _
    // Predicated region
    $region6: #{tpu_custom_call.1} parent=1 // pred_check
      _
    $region7: #{tpu_custom_call.1} parent=1 // pred_check_branch
      %55 = sbr.rel (0) target = $region9
    $region8: #{tpu_custom_call.1} parent=1 // pred_region
      %57 = vsyncadd [#allocation6], 0
      %s59 = sshll.u32 %s1, 4
      %s60 = int_to_ptr.vmem [resolvable:$true] %s59
      %62 = dma.vmem_to_smem %s60, 16, [#allocation7], [#allocation6]
    $region9: #{tpu_custom_call.1} parent=1 // pred_fallthru
      _
    // Predicated region
    $region10: #{tpu_custom_call.1} parent=1 // pred_check
      _
    $region11: #{tpu_custom_call.1} parent=1 // pred_check_branch
      %64 = sbr.rel (0) target = $region13
    $region12: #{tpu_custom_call.1} parent=1 // pred_region
      _
    $region13: #{tpu_custom_call.1} parent=1 // pred_fallthru
      _
    // Predicated region
    $region14: #{tpu_custom_call.1} parent=1 // pred_check
      _
    $region15: #{tpu_custom_call.1} parent=1 // pred_check_branch
      %66 = sbr.rel (0) target = $region17
    $region16: #{tpu_custom_call.1} parent=1 // pred_region
      %68 = vsyncadd [#allocation9], 0
      %s69 = sshll.u32 %s3, 4
      %s70 = int_to_ptr.hbm [resolvable:$true] %s69
      %s71 = sshll.u32 [#allocation8], 4
      %s72 = int_to_ptr.vmem [resolvable:$true] %s71
      %77 = dma.hbm_to_vmem [thread:$0]  %s70, 2048, %s72, [#allocation9], 128, 128, 8
    $region17: #{tpu_custom_call.1} parent=1 // pred_fallthru
      _
    // Predicated region
    $region18: #{tpu_custom_call.1} parent=1 // pred_check
      _
    $region19: #{tpu_custom_call.1} parent=1 // pred_check_branch
      %79 = sbr.rel (0) target = $region21
    $region20: #{tpu_custom_call.1} parent=1 // pred_region
      _
    $region21: #{tpu_custom_call.1} parent=1 // pred_fallthru
      _
    // Predicated region
    $region22: #{tpu_custom_call.1} parent=1 // pred_check
      _
    $region23: #{tpu_custom_call.1} parent=1 // pred_check_branch
      %81 = sbr.rel (0) target = $region25
    $region24: #{tpu_custom_call.1} parent=1 // pred_region
      %83 = vsyncadd [#allocation9], 0
      %s84 = sshll.u32 %s5, 4
      %s85 = int_to_ptr.hbm [resolvable:$true] %s84
      %s86 = sshll.u32 [#allocation10], 4
      %s87 = int_to_ptr.vmem [resolvable:$true] %s86
      %92 = dma.hbm_to_vmem [thread:$0]  %s85, 2048, %s87, [#allocation9], 128, 128, 8
    $region25: #{tpu_custom_call.1} parent=1 // pred_fallthru
      _
    // Predicated region
    $region26: #{tpu_custom_call.1} parent=1 // pred_check
      _
    $region27: #{tpu_custom_call.1} parent=1 // pred_check_branch
      %94 = sbr.rel (0) target = $region29
    $region28: #{tpu_custom_call.1} parent=1 // pred_region
      _
    $region29: #{tpu_custom_call.1} parent=1 // pred_fallthru
      _
    // Predicated region
    $region30: #{tpu_custom_call.1} parent=1 // pred_check
      _
    $region31: #{tpu_custom_call.1} parent=1 // pred_check_branch
      %96 = sbr.rel (0) target = $region33
    $region32: #{tpu_custom_call.1} parent=1 // pred_region
      %98 = vsyncadd [#allocation12], 0
      %s99 = sshll.u32 %s7, 4
      %s100 = int_to_ptr.hbm [resolvable:$true] %s99
      %s101 = sshll.u32 [#allocation11], 4
      %s102 = int_to_ptr.vmem [resolvable:$true] %s101
      %107 = dma.hbm_to_vmem [thread:$0]  %s100, 2048, %s102, [#allocation12], 128, 128, 8
    $region33: #{tpu_custom_call.1} parent=1 // pred_fallthru
      _
    // Predicated region
    $region34: #{tpu_custom_call.1} parent=1 // pred_check
      _
    $region35: #{tpu_custom_call.1} parent=1 // pred_check_branch
      %109 = sbr.rel (0) target = $region37
    $region36: #{tpu_custom_call.1} parent=1 // pred_region
      _
    $region37: #{tpu_custom_call.1} parent=1 // pred_fallthru
      _
    // Predicated region
    $region38: #{tpu_custom_call.1} parent=1 // pred_check
      _
    $region39: #{tpu_custom_call.1} parent=1 // pred_check_branch
      %111 = sbr.rel (0) target = $region41
    $region40: #{tpu_custom_call.1} parent=1 // pred_region
      %113 = vsyncadd [#allocation12], 0
      %s114 = sshll.u32 %s9, 4
      %s115 = int_to_ptr.hbm [resolvable:$true] %s114
      %s116 = sshll.u32 [#allocation13], 4
      %s117 = int_to_ptr.vmem [resolvable:$true] %s116
      %122 = dma.hbm_to_vmem [thread:$0]  %s115, 2048, %s117, [#allocation12], 128, 128, 8
    $region41: #{tpu_custom_call.1} parent=1 // pred_fallthru
      _
    // Predicated region
    $region42: #{tpu_custom_call.1} parent=1 // pred_check
      _
    $region43: #{tpu_custom_call.1} parent=1 // pred_check_branch
      %124 = sbr.rel (0) target = $region45
    $region44: #{tpu_custom_call.1} parent=1 // pred_region
      _
    $region45: #{tpu_custom_call.1} parent=1 // pred_fallthru
      _
    // Predicated region
    $region46: #{tpu_custom_call.1} parent=1 // pred_check
      _
    $region47: #{tpu_custom_call.1} parent=1 // pred_check_branch
      %126 = sbr.rel (0) target = $region49
    $region48: #{tpu_custom_call.1} parent=1 // pred_region
      %128 = vsyncadd [#allocation15], 0
      %s129 = sshll.u32 %s11, 4
      %s130 = int_to_ptr.hbm [resolvable:$true] %s129
      %s131 = sshll.u32 [#allocation14], 4
      %s132 = int_to_ptr.vmem [resolvable:$true] %s131
      %137 = dma.hbm_to_vmem [thread:$0]  %s130, 2048, %s132, [#allocation15], 128, 128, 8
    $region49: #{tpu_custom_call.1} parent=1 // pred_fallthru
      _
    // Predicated region
    $region50: #{tpu_custom_call.1} parent=1 // pred_check
      _
    $region51: #{tpu_custom_call.1} parent=1 // pred_check_branch
      %139 = sbr.rel (0) target = $region53
    $region52: #{tpu_custom_call.1} parent=1 // pred_region
      _
    $region53: #{tpu_custom_call.1} parent=1 // pred_fallthru
      _
    // Predicated region
    $region54: #{tpu_custom_call.1} parent=1 // pred_check
      _
    $region55: #{tpu_custom_call.1} parent=1 // pred_check_branch
      %141 = sbr.rel (0) target = $region57
    $region56: #{tpu_custom_call.1} parent=1 // pred_region
      %143 = vsyncadd [#allocation15], 0
      %s144 = sshll.u32 %s13, 4
      %s145 = int_to_ptr.hbm [resolvable:$true] %s144
      %s146 = sshll.u32 [#allocation16], 4
      %s147 = int_to_ptr.vmem [resolvable:$true] %s146
      %152 = dma.hbm_to_vmem [thread:$0]  %s145, 2048, %s147, [#allocation15], 128, 128, 8
    $region57: #{tpu_custom_call.1} parent=1 // pred_fallthru
      _
    // Predicated region
    $region58: #{tpu_custom_call.1} parent=1 // pred_check
      _
    $region59: #{tpu_custom_call.1} parent=1 // pred_check_branch
      %154 = sbr.rel (0) target = $region61
    $region60: #{tpu_custom_call.1} parent=1 // pred_region
      _
    $region61: #{tpu_custom_call.1} parent=1 // pred_fallthru
      _
    // Predicated region
    $region62: #{tpu_custom_call.1} parent=1 // pred_check
      _
    $region63: #{tpu_custom_call.1} parent=1 // pred_check_branch
      %156 = sbr.rel (0) target = $region65
    $region64: #{tpu_custom_call.1} parent=1 // pred_region
      %158 = vsyncadd [#allocation18], 0
      %s159 = sshll.u32 %s15, 4
      %s160 = int_to_ptr.hbm [resolvable:$true] %s159
      %s161 = sshll.u32 [#allocation17], 4
      %s162 = int_to_ptr.vmem [resolvable:$true] %s161
      %167 = dma.hbm_to_vmem [thread:$0]  %s160, 2048, %s162, [#allocation18], 128, 128, 8
    $region65: #{tpu_custom_call.1} parent=1 // pred_fallthru
      _
    // Predicated region
    $region66: #{tpu_custom_call.1} parent=1 // pred_check
      _
    $region67: #{tpu_custom_call.1} parent=1 // pred_check_branch
      %169 = sbr.rel (0) target = $region69
    $region68: #{tpu_custom_call.1} parent=1 // pred_region
      _
    $region69: #{tpu_custom_call.1} parent=1 // pred_fallthru
      _
    // Predicated region
    $region70: #{tpu_custom_call.1} parent=1 // pred_check
      _
    $region71: #{tpu_custom_call.1} parent=1 // pred_check_branch
      %171 = sbr.rel (0) target = $region73
    $region72: #{tpu_custom_call.1} parent=1 // pred_region
      %173 = vsyncadd [#allocation18], 0
      %s174 = sshll.u32 %s17, 4
      %s175 = int_to_ptr.hbm [resolvable:$true] %s174
      %s176 = sshll.u32 [#allocation19], 4
      %s177 = int_to_ptr.vmem [resolvable:$true] %s176
      %182 = dma.hbm_to_vmem [thread:$0]  %s175, 2048, %s177, [#allocation18], 128, 128, 8
    $region73: #{tpu_custom_call.1} parent=1 // pred_fallthru
      _
    // Predicated region
    $region74: #{tpu_custom_call.1} parent=1 // pred_check
      _
    $region75: #{tpu_custom_call.1} parent=1 // pred_check_branch
      %184 = sbr.rel (0) target = $region77
    $region76: #{tpu_custom_call.1} parent=1 // pred_region
      _
    $region77: #{tpu_custom_call.1} parent=1 // pred_fallthru
      _
    // Predicated region
    $region78: #{tpu_custom_call.1} parent=1 // pred_check
      _
    $region79: #{tpu_custom_call.1} parent=1 // pred_check_branch
      %186 = sbr.rel (0) target = $region81
    $region80: #{tpu_custom_call.1} parent=1 // pred_region
      %188 = dma.done [#allocation4], 512
    $region81: #{tpu_custom_call.1} parent=1 // pred_fallthru
      _
    // Predicated region
    $region82: #{tpu_custom_call.1} parent=1 // pred_check
      _
    $region83: #{tpu_custom_call.1} parent=1 // pred_check_branch
      %190 = sbr.rel (0) target = $region85
    $region84: #{tpu_custom_call.1} parent=1 // pred_region
      %192 = dma.done [#allocation6], 16
    $region85: #{tpu_custom_call.1} parent=1 // pred_fallthru
      _
    // Predicated region
    $region86: #{tpu_custom_call.1} parent=1 // pred_check
      _
    $region87: #{tpu_custom_call.1} parent=1 // pred_check_branch
      %194 = sbr.rel (0) target = $region89
    $region88: #{tpu_custom_call.1} parent=1 // pred_region
      %196 = dma.done [#allocation9], 2048
    $region89: #{tpu_custom_call.1} parent=1 // pred_fallthru
      _
    // Predicated region
    $region90: #{tpu_custom_call.1} parent=1 // pred_check
      _
    $region91: #{tpu_custom_call.1} parent=1 // pred_check_branch
      %198 = sbr.rel (0) target = $region93
    $region92: #{tpu_custom_call.1} parent=1 // pred_region
      %200 = dma.done [#allocation9], 2048
    $region93: #{tpu_custom_call.1} parent=1 // pred_fallthru
      _
    // Predicated region
    $region94: #{tpu_custom_call.1} parent=1 // pred_check
      _
    $region95: #{tpu_custom_call.1} parent=1 // pred_check_branch
      %202 = sbr.rel (0) target = $region97
    $region96: #{tpu_custom_call.1} parent=1 // pred_region
      %204 = dma.done [#allocation12], 2048
    $region97: #{tpu_custom_call.1} parent=1 // pred_fallthru
      _
    // Predicated region
    $region98: #{tpu_custom_call.1} parent=1 // pred_check
      _
    $region99: #{tpu_custom_call.1} parent=1 // pred_check_branch
      %206 = sbr.rel (0) target = $region101
    $region100: #{tpu_custom_call.1} parent=1 // pred_region
      %208 = dma.done [#allocation12], 2048
    $region101: #{tpu_custom_call.1} parent=1 // pred_fallthru
      _
    // Predicated region
    $region102: #{tpu_custom_call.1} parent=1 // pred_check
      _
    $region103: #{tpu_custom_call.1} parent=1 // pred_check_branch
      %210 = sbr.rel (0) target = $region105
    $region104: #{tpu_custom_call.1} parent=1 // pred_region
      %212 = dma.done [#allocation15], 2048
    $region105: #{tpu_custom_call.1} parent=1 // pred_fallthru
      _
    // Predicated region
    $region106: #{tpu_custom_call.1} parent=1 // pred_check
      _
    $region107: #{tpu_custom_call.1} parent=1 // pred_check_branch
      %214 = sbr.rel (0) target = $region109
    $region108: #{tpu_custom_call.1} parent=1 // pred_region
      %216 = dma.done [#allocation15], 2048
    $region109: #{tpu_custom_call.1} parent=1 // pred_fallthru
      _
    // Predicated region
    $region110: #{tpu_custom_call.1} parent=1 // pred_check
      _
    $region111: #{tpu_custom_call.1} parent=1 // pred_check_branch
      %218 = sbr.rel (0) target = $region113
    $region112: #{tpu_custom_call.1} parent=1 // pred_region
      %220 = dma.done [#allocation18], 2048
    $region113: #{tpu_custom_call.1} parent=1 // pred_fallthru
      _
    // Predicated region
    $region114: #{tpu_custom_call.1} parent=1 // pred_check
      _
    $region115: #{tpu_custom_call.1} parent=1 // pred_check_branch
      %222 = sbr.rel (0) target = $region117
    $region116: #{tpu_custom_call.1} parent=1 // pred_region
      %224 = dma.done [#allocation18], 2048
    $region117: #{tpu_custom_call.1} parent=1 // pred_fallthru
      _
    %225 = sfence
    %v226 = vld [vmem:[#allocation3] sm:$0xf]
    %v227 = vld [vmem:[#allocation3 + $0x4] sm:$0xf]
    %v228 = vld [vmem:[#allocation3 + $0x8] sm:$0xf]
    %v229 = vld [vmem:[#allocation3 + $0xc] sm:$0xf]
    %v230 = vld [vmem:[#allocation3 + $0x10] sm:$0xf]
    %v231 = vld [vmem:[#allocation3 + $0x14] sm:$0xf]
    %v232 = vld [vmem:[#allocation3 + $0x18] sm:$0xf]
    %v233 = vld [vmem:[#allocation3 + $0x1c] sm:$0xf]
    %s234 = sld [smem:[#allocation7]]
    %v235 = vstv %s234
    %v236 = vmul.f32 %v226, %v235
    %v237 = vmul.f32 %v227, %v235
    %v238 = vmul.f32 %v228, %v235
    %v239 = vmul.f32 %v229, %v235
    %v240 = vmul.f32 %v230, %v235
    %v241 = vmul.f32 %v231, %v235
    %v242 = vmul.f32 %v232, %v235
    %v243 = vmul.f32 %v233, %v235
    %s244 = sld [smem:[#allocation7 + $0x1]]
    %v245 = vstv %s244
    %v246 = vmul.f32 %v226, %v245
    %v247 = vmul.f32 %v227, %v245
    %v248 = vmul.f32 %v228, %v245
    %v249 = vmul.f32 %v229, %v245
    %v250 = vmul.f32 %v230, %v245
    %v251 = vmul.f32 %v231, %v245
    %v252 = vmul.f32 %v232, %v245
    %v253 = vmul.f32 %v233, %v245
    %s254 = sld [smem:[#allocation7 + $0x2]]
    %v255 = vstv %s254
    %v256 = vmul.f32 %v226, %v255
    %v257 = vmul.f32 %v227, %v255
    %v258 = vmul.f32 %v228, %v255
    %v259 = vmul.f32 %v229, %v255
    %v260 = vmul.f32 %v230, %v255
    %v261 = vmul.f32 %v231, %v255
    %v262 = vmul.f32 %v232, %v255
    %v263 = vmul.f32 %v233, %v255
    %v272 = vrot.slane %v256, 2
    %v273 = vrot.slane %v257, 2
    %v274 = vrot.slane %v258, 2
    %v275 = vrot.slane %v259, 2
    %v276 = vrot.slane %v260, 2
    %v277 = vrot.slane %v261, 2
    %v278 = vrot.slane %v262, 2
    %v279 = vrot.slane %v263, 2
    %v288 = vadd.f32 %v236, %v272
    %v289 = vadd.f32 %v237, %v273
    %v290 = vadd.f32 %v238, %v274
    %v291 = vadd.f32 %v239, %v275
    %v292 = vadd.f32 %v240, %v276
    %v293 = vadd.f32 %v241, %v277
    %v294 = vadd.f32 %v242, %v278
    %v295 = vadd.f32 %v243, %v279
    %s296 = sld [smem:[#allocation7 + $0x3]]
    %v297 = vstv %s296
    %v298 = vmul.f32 %v226, %v297
    %v299 = vmul.f32 %v227, %v297
    %v300 = vmul.f32 %v228, %v297
    %v301 = vmul.f32 %v229, %v297
    %v302 = vmul.f32 %v230, %v297
    %v303 = vmul.f32 %v231, %v297
    %v304 = vmul.f32 %v232, %v297
    %v305 = vmul.f32 %v233, %v297
    %v314 = vrot.slane %v298, 2
    %v315 = vrot.slane %v299, 2
    %v316 = vrot.slane %v300, 2
    %v317 = vrot.slane %v301, 2
    %v318 = vrot.slane %v302, 2
    %v319 = vrot.slane %v303, 2
    %v320 = vrot.slane %v304, 2
    %v321 = vrot.slane %v305, 2
    %v330 = vadd.f32 %v246, %v314
    %v331 = vadd.f32 %v247, %v315
    %v332 = vadd.f32 %v248, %v316
    %v333 = vadd.f32 %v249, %v317
    %v334 = vadd.f32 %v250, %v318
    %v335 = vadd.f32 %v251, %v319
    %v336 = vadd.f32 %v252, %v320
    %v337 = vadd.f32 %v253, %v321
    %v346 = vrot.slane %v330, 1
    %v347 = vrot.slane %v331, 1
    %v348 = vrot.slane %v332, 1
    %v349 = vrot.slane %v333, 1
    %v350 = vrot.slane %v334, 1
    %v351 = vrot.slane %v335, 1
    %v352 = vrot.slane %v336, 1
    %v353 = vrot.slane %v337, 1
    %v362 = vadd.f32 %v288, %v346
    %v363 = vadd.f32 %v289, %v347
    %v364 = vadd.f32 %v290, %v348
    %v365 = vadd.f32 %v291, %v349
    %v366 = vadd.f32 %v292, %v350
    %v367 = vadd.f32 %v293, %v351
    %v368 = vadd.f32 %v294, %v352
    %v369 = vadd.f32 %v295, %v353
    %s370 = sld [smem:[#allocation2]]
    %v371 = vstv %s370
    %v372 = vadd.f32 %v362, %v371
    %v373 = vadd.f32 %v363, %v371
    %v374 = vadd.f32 %v364, %v371
    %v375 = vadd.f32 %v365, %v371
    %v376 = vadd.f32 %v366, %v371
    %v377 = vadd.f32 %v367, %v371
    %v378 = vadd.f32 %v368, %v371
    %v379 = vadd.f32 %v369, %v371
    %v388 = vrot.slane %v373, 7
    %vm389 = vcmask 1041409
    %v390 = vsel %vm389, %v388, %v372
    %v391 = vrot.slane %v374, 6
    %vm392 = vcmask 1042434
    %v393 = vsel %vm392, %v391, %v390
    %v394 = vrot.slane %v375, 5
    %vm395 = vcmask 1043459
    %v396 = vsel %vm395, %v394, %v393
    %v397 = vrot.slane %v376, 4
    %vm398 = vcmask 1044484
    %v399 = vsel %vm398, %v397, %v396
    %v400 = vrot.slane %v377, 3
    %vm401 = vcmask 1045509
    %v402 = vsel %vm401, %v400, %v399
    %v403 = vrot.slane %v378, 2
    %vm404 = vcmask 1046534
    %v405 = vsel %vm404, %v403, %v402
    %v406 = vrot.slane %v379, 1
    %vm407 = vcmask 1047559
    %v408 = vsel %vm407, %v406, %v405
    %410 = vst [vmem:[#allocation27] sm:$0xff] %v408
    %v411 = vld [vmem:[#allocation8] sm:$0xff]
    %v412 = vld [vmem:[#allocation8 + $0x8] sm:$0xff]
    %v413 = vld [vmem:[#allocation8 + $0x10] sm:$0xff]
    %v414 = vld [vmem:[#allocation8 + $0x18] sm:$0xff]
    %v415 = vld [vmem:[#allocation8 + $0x20] sm:$0xff]
    %v416 = vld [vmem:[#allocation8 + $0x28] sm:$0xff]
    %v417 = vld [vmem:[#allocation8 + $0x30] sm:$0xff]
    %v418 = vld [vmem:[#allocation8 + $0x38] sm:$0xff]
    %v419 = vld [vmem:[#allocation8 + $0x40] sm:$0xff]
    %v420 = vld [vmem:[#allocation8 + $0x48] sm:$0xff]
    %v421 = vld [vmem:[#allocation8 + $0x50] sm:$0xff]
    %v422 = vld [vmem:[#allocation8 + $0x58] sm:$0xff]
    %v423 = vld [vmem:[#allocation8 + $0x60] sm:$0xff]
    %v424 = vld [vmem:[#allocation8 + $0x68] sm:$0xff]
    %v425 = vld [vmem:[#allocation8 + $0x70] sm:$0xff]
    %v426 = vld [vmem:[#allocation8 + $0x78] sm:$0xff]
    %v427 = vld [vmem:[%s4] sm:$0x1]
    %v429 = vperm.slane %v427, 0
    %431 = vmatpush.msra.mxu0 %v426
    %432 = vmatpush.msra.mxu0 %v425
    %433 = vmatpush.msra.mxu0 %v424
    %434 = vmatpush.msra.mxu0 %v423
    %435 = vmatpush.msra.mxu0 %v422
    %436 = vmatpush.msra.mxu0 %v421
    %437 = vmatpush.msra.mxu0 %v420
    %438 = vmatpush.msra.mxu0 %v419
    %439 = vmatpush.msra.mxu0 %v418
    %440 = vmatpush.msra.mxu0 %v417
    %441 = vmatpush.msra.mxu0 %v416
    %442 = vmatpush.msra.mxu0 %v415
    %443 = vmatpush.msra.mxu0 %v414
    %444 = vmatpush.msra.mxu0 %v413
    %445 = vmatpush.msra.mxu0 %v412
    %446 = vmatpush.msra.mxu0 %v411
    %447 = vmatmul.f32.gmra.mxu0 %v408
    %v448 = vpop.f32.mrf.mxu0
    %v449 = vadd.f32 %v429, %v448
    %450 = vdwg.mxu0
    %v451 = vmax.f32 %v449, 0.0
    %452 = vst [vmem:[#allocation21] sm:$0xff] %v451
    %v453 = vld [vmem:[#allocation10] sm:$0xff]
    %v454 = vld [vmem:[#allocation10 + $0x8] sm:$0xff]
    %v455 = vld [vmem:[#allocation10 + $0x10] sm:$0xff]
    %v456 = vld [vmem:[#allocation10 + $0x18] sm:$0xff]
    %v457 = vld [vmem:[#allocation10 + $0x20] sm:$0xff]
    %v458 = vld [vmem:[#allocation10 + $0x28] sm:$0xff]
    %v459 = vld [vmem:[#allocation10 + $0x30] sm:$0xff]
    %v460 = vld [vmem:[#allocation10 + $0x38] sm:$0xff]
    %v461 = vld [vmem:[#allocation10 + $0x40] sm:$0xff]
    %v462 = vld [vmem:[#allocation10 + $0x48] sm:$0xff]
    %v463 = vld [vmem:[#allocation10 + $0x50] sm:$0xff]
    %v464 = vld [vmem:[#allocation10 + $0x58] sm:$0xff]
    %v465 = vld [vmem:[#allocation10 + $0x60] sm:$0xff]
    %v466 = vld [vmem:[#allocation10 + $0x68] sm:$0xff]
    %v467 = vld [vmem:[#allocation10 + $0x70] sm:$0xff]
    %v468 = vld [vmem:[#allocation10 + $0x78] sm:$0xff]
    %v469 = vld [vmem:[%s6] sm:$0x1]
    %v471 = vperm.slane %v469, 0
    %473 = vmatpush.msra.mxu0 %v468
    %474 = vmatpush.msra.mxu0 %v467
    %475 = vmatpush.msra.mxu0 %v466
    %476 = vmatpush.msra.mxu0 %v465
    %477 = vmatpush.msra.mxu0 %v464
    %478 = vmatpush.msra.mxu0 %v463
    %479 = vmatpush.msra.mxu0 %v462
    %480 = vmatpush.msra.mxu0 %v461
    %481 = vmatpush.msra.mxu0 %v460
    %482 = vmatpush.msra.mxu0 %v459
    %483 = vmatpush.msra.mxu0 %v458
    %484 = vmatpush.msra.mxu0 %v457
    %485 = vmatpush.msra.mxu0 %v456
    %486 = vmatpush.msra.mxu0 %v455
    %487 = vmatpush.msra.mxu0 %v454
    %488 = vmatpush.msra.mxu0 %v453
    %489 = vmatmul.f32.gmra.mxu0 %v451
    %v490 = vpop.f32.mrf.mxu0
    %v491 = vadd.f32 %v471, %v490
    %492 = vdwg.mxu0
    %v493 = vmax.f32 %v491, 0.0
    %494 = vst [vmem:[#allocation23] sm:$0xff] %v493
    %v495 = vld [vmem:[#allocation11] sm:$0xff]
    %v496 = vld [vmem:[#allocation11 + $0x8] sm:$0xff]
    %v497 = vld [vmem:[#allocation11 + $0x10] sm:$0xff]
    %v498 = vld [vmem:[#allocation11 + $0x18] sm:$0xff]
    %v499 = vld [vmem:[#allocation11 + $0x20] sm:$0xff]
    %v500 = vld [vmem:[#allocation11 + $0x28] sm:$0xff]
    %v501 = vld [vmem:[#allocation11 + $0x30] sm:$0xff]
    %v502 = vld [vmem:[#allocation11 + $0x38] sm:$0xff]
    %v503 = vld [vmem:[#allocation11 + $0x40] sm:$0xff]
    %v504 = vld [vmem:[#allocation11 + $0x48] sm:$0xff]
    %v505 = vld [vmem:[#allocation11 + $0x50] sm:$0xff]
    %v506 = vld [vmem:[#allocation11 + $0x58] sm:$0xff]
    %v507 = vld [vmem:[#allocation11 + $0x60] sm:$0xff]
    %v508 = vld [vmem:[#allocation11 + $0x68] sm:$0xff]
    %v509 = vld [vmem:[#allocation11 + $0x70] sm:$0xff]
    %v510 = vld [vmem:[#allocation11 + $0x78] sm:$0xff]
    %v511 = vld [vmem:[%s8] sm:$0x1]
    %v513 = vperm.slane %v511, 0
    %515 = vmatpush.msra.mxu0 %v510
    %516 = vmatpush.msra.mxu0 %v509
    %517 = vmatpush.msra.mxu0 %v508
    %518 = vmatpush.msra.mxu0 %v507
    %519 = vmatpush.msra.mxu0 %v506
    %520 = vmatpush.msra.mxu0 %v505
    %521 = vmatpush.msra.mxu0 %v504
    %522 = vmatpush.msra.mxu0 %v503
    %523 = vmatpush.msra.mxu0 %v502
    %524 = vmatpush.msra.mxu0 %v501
    %525 = vmatpush.msra.mxu0 %v500
    %526 = vmatpush.msra.mxu0 %v499
    %527 = vmatpush.msra.mxu0 %v498
    %528 = vmatpush.msra.mxu0 %v497
    %529 = vmatpush.msra.mxu0 %v496
    %530 = vmatpush.msra.mxu0 %v495
    %531 = vmatmul.f32.gmra.mxu0 %v493
    %v532 = vpop.f32.mrf.mxu0
    %v533 = vadd.f32 %v513, %v532
    %534 = vdwg.mxu0
    %v535 = vmax.f32 %v533, 0.0
    %536 = vst [vmem:[#allocation24] sm:$0xff] %v535
    %v537 = vld [vmem:[#allocation13] sm:$0xff]
    %v538 = vld [vmem:[#allocation13 + $0x8] sm:$0xff]
    %v539 = vld [vmem:[#allocation13 + $0x10] sm:$0xff]
    %v540 = vld [vmem:[#allocation13 + $0x18] sm:$0xff]
    %v541 = vld [vmem:[#allocation13 + $0x20] sm:$0xff]
    %v542 = vld [vmem:[#allocation13 + $0x28] sm:$0xff]
    %v543 = vld [vmem:[#allocation13 + $0x30] sm:$0xff]
    %v544 = vld [vmem:[#allocation13 + $0x38] sm:$0xff]
    %v545 = vld [vmem:[#allocation13 + $0x40] sm:$0xff]
    %v546 = vld [vmem:[#allocation13 + $0x48] sm:$0xff]
    %v547 = vld [vmem:[#allocation13 + $0x50] sm:$0xff]
    %v548 = vld [vmem:[#allocation13 + $0x58] sm:$0xff]
    %v549 = vld [vmem:[#allocation13 + $0x60] sm:$0xff]
    %v550 = vld [vmem:[#allocation13 + $0x68] sm:$0xff]
    %v551 = vld [vmem:[#allocation13 + $0x70] sm:$0xff]
    %v552 = vld [vmem:[#allocation13 + $0x78] sm:$0xff]
    %v553 = vld [vmem:[%s10] sm:$0x1]
    %v555 = vperm.slane %v553, 0
    %557 = vmatpush.msra.mxu0 %v552
    %558 = vmatpush.msra.mxu0 %v551
    %559 = vmatpush.msra.mxu0 %v550
    %560 = vmatpush.msra.mxu0 %v549
    %561 = vmatpush.msra.mxu0 %v548
    %562 = vmatpush.msra.mxu0 %v547
    %563 = vmatpush.msra.mxu0 %v546
    %564 = vmatpush.msra.mxu0 %v545
    %565 = vmatpush.msra.mxu0 %v544
    %566 = vmatpush.msra.mxu0 %v543
    %567 = vmatpush.msra.mxu0 %v542
    %568 = vmatpush.msra.mxu0 %v541
    %569 = vmatpush.msra.mxu0 %v540
    %570 = vmatpush.msra.mxu0 %v539
    %571 = vmatpush.msra.mxu0 %v538
    %572 = vmatpush.msra.mxu0 %v537
    %573 = vmatmul.f32.gmra.mxu0 %v535
    %v574 = vpop.f32.mrf.mxu0
    %v575 = vadd.f32 %v555, %v574
    %576 = vdwg.mxu0
    %577 = vst [vmem:[#allocation26] sm:$0xff] %v575
    %v578 = vld [vmem:[#allocation14] sm:$0xff]
    %v579 = vld [vmem:[#allocation14 + $0x8] sm:$0xff]
    %v580 = vld [vmem:[#allocation14 + $0x10] sm:$0xff]
    %v581 = vld [vmem:[#allocation14 + $0x18] sm:$0xff]
    %v582 = vld [vmem:[#allocation14 + $0x20] sm:$0xff]
    %v583 = vld [vmem:[#allocation14 + $0x28] sm:$0xff]
    %v584 = vld [vmem:[#allocation14 + $0x30] sm:$0xff]
    %v585 = vld [vmem:[#allocation14 + $0x38] sm:$0xff]
    %v586 = vld [vmem:[#allocation14 + $0x40] sm:$0xff]
    %v587 = vld [vmem:[#allocation14 + $0x48] sm:$0xff]
    %v588 = vld [vmem:[#allocation14 + $0x50] sm:$0xff]
    %v589 = vld [vmem:[#allocation14 + $0x58] sm:$0xff]
    %v590 = vld [vmem:[#allocation14 + $0x60] sm:$0xff]
    %v591 = vld [vmem:[#allocation14 + $0x68] sm:$0xff]
    %v592 = vld [vmem:[#allocation14 + $0x70] sm:$0xff]
    %v593 = vld [vmem:[#allocation14 + $0x78] sm:$0xff]
    %v594 = vld [vmem:[%s12] sm:$0x1]
    %v596 = vperm.slane %v594, 0
    %598 = vmatpush.msra.mxu0 %v593
    %599 = vmatpush.msra.mxu0 %v592
    %600 = vmatpush.msra.mxu0 %v591
    %601 = vmatpush.msra.mxu0 %v590
    %602 = vmatpush.msra.mxu0 %v589
    %603 = vmatpush.msra.mxu0 %v588
    %604 = vmatpush.msra.mxu0 %v587
    %605 = vmatpush.msra.mxu0 %v586
    %606 = vmatpush.msra.mxu0 %v585
    %607 = vmatpush.msra.mxu0 %v584
    %608 = vmatpush.msra.mxu0 %v583
    %609 = vmatpush.msra.mxu0 %v582
    %610 = vmatpush.msra.mxu0 %v581
    %611 = vmatpush.msra.mxu0 %v580
    %612 = vmatpush.msra.mxu0 %v579
    %613 = vmatpush.msra.mxu0 %v578
    %614 = vmatmul.f32.gmra.mxu0 %v575
    %v615 = vpop.f32.mrf.mxu0
    %v616 = vadd.f32 %v596, %v615
    %617 = vdwg.mxu0
    %v618 = vmax.f32 %v616, 0.0
    %v619 = vld [vmem:[#allocation16] sm:$0xff]
    %v620 = vld [vmem:[#allocation16 + $0x8] sm:$0xff]
    %v621 = vld [vmem:[#allocation16 + $0x10] sm:$0xff]
    %v622 = vld [vmem:[#allocation16 + $0x18] sm:$0xff]
    %v623 = vld [vmem:[#allocation16 + $0x20] sm:$0xff]
    %v624 = vld [vmem:[#allocation16 + $0x28] sm:$0xff]
    %v625 = vld [vmem:[#allocation16 + $0x30] sm:$0xff]
    %v626 = vld [vmem:[#allocation16 + $0x38] sm:$0xff]
    %v627 = vld [vmem:[#allocation16 + $0x40] sm:$0xff]
    %v628 = vld [vmem:[#allocation16 + $0x48] sm:$0xff]
    %v629 = vld [vmem:[#allocation16 + $0x50] sm:$0xff]
    %v630 = vld [vmem:[#allocation16 + $0x58] sm:$0xff]
    %v631 = vld [vmem:[#allocation16 + $0x60] sm:$0xff]
    %v632 = vld [vmem:[#allocation16 + $0x68] sm:$0xff]
    %v633 = vld [vmem:[#allocation16 + $0x70] sm:$0xff]
    %v634 = vld [vmem:[#allocation16 + $0x78] sm:$0xff]
    %v635 = vld [vmem:[%s14] sm:$0x1]
    %v637 = vperm.slane %v635, 0
    %639 = vmatpush.msra.mxu0 %v634
    %640 = vmatpush.msra.mxu0 %v633
    %641 = vmatpush.msra.mxu0 %v632
    %642 = vmatpush.msra.mxu0 %v631
    %643 = vmatpush.msra.mxu0 %v630
    %644 = vmatpush.msra.mxu0 %v629
    %645 = vmatpush.msra.mxu0 %v628
    %646 = vmatpush.msra.mxu0 %v627
    %647 = vmatpush.msra.mxu0 %v626
    %648 = vmatpush.msra.mxu0 %v625
    %649 = vmatpush.msra.mxu0 %v624
    %650 = vmatpush.msra.mxu0 %v623
    %651 = vmatpush.msra.mxu0 %v622
    %652 = vmatpush.msra.mxu0 %v621
    %653 = vmatpush.msra.mxu0 %v620
    %654 = vmatpush.msra.mxu0 %v619
    %655 = vmatmul.f32.gmra.mxu0 %v618
    %v656 = vpop.f32.mrf.mxu0
    %v657 = vadd.f32 %v637, %v656
    %658 = vdwg.mxu0
    %v659 = vmax.f32 %v657, 0.0
    %v660 = vld [vmem:[#allocation17] sm:$0xff]
    %v661 = vld [vmem:[#allocation17 + $0x8] sm:$0xff]
    %v662 = vld [vmem:[#allocation17 + $0x10] sm:$0xff]
    %v663 = vld [vmem:[#allocation17 + $0x18] sm:$0xff]
    %v664 = vld [vmem:[#allocation17 + $0x20] sm:$0xff]
    %v665 = vld [vmem:[#allocation17 + $0x28] sm:$0xff]
    %v666 = vld [vmem:[#allocation17 + $0x30] sm:$0xff]
    %v667 = vld [vmem:[#allocation17 + $0x38] sm:$0xff]
    %v668 = vld [vmem:[#allocation17 + $0x40] sm:$0xff]
    %v669 = vld [vmem:[#allocation17 + $0x48] sm:$0xff]
    %v670 = vld [vmem:[#allocation17 + $0x50] sm:$0xff]
    %v671 = vld [vmem:[#allocation17 + $0x58] sm:$0xff]
    %v672 = vld [vmem:[#allocation17 + $0x60] sm:$0xff]
    %v673 = vld [vmem:[#allocation17 + $0x68] sm:$0xff]
    %v674 = vld [vmem:[#allocation17 + $0x70] sm:$0xff]
    %v675 = vld [vmem:[#allocation17 + $0x78] sm:$0xff]
    %v676 = vld [vmem:[%s16] sm:$0x1]
    %v678 = vperm.slane %v676, 0
    %680 = vmatpush.msra.mxu0 %v675
    %681 = vmatpush.msra.mxu0 %v674
    %682 = vmatpush.msra.mxu0 %v673
    %683 = vmatpush.msra.mxu0 %v672
    %684 = vmatpush.msra.mxu0 %v671
    %685 = vmatpush.msra.mxu0 %v670
    %686 = vmatpush.msra.mxu0 %v669
    %687 = vmatpush.msra.mxu0 %v668
    %688 = vmatpush.msra.mxu0 %v667
    %689 = vmatpush.msra.mxu0 %v666
    %690 = vmatpush.msra.mxu0 %v665
    %691 = vmatpush.msra.mxu0 %v664
    %692 = vmatpush.msra.mxu0 %v663
    %693 = vmatpush.msra.mxu0 %v662
    %694 = vmatpush.msra.mxu0 %v661
    %695 = vmatpush.msra.mxu0 %v660
    %696 = vmatmul.f32.gmra.mxu0 %v659
    %v697 = vpop.f32.mrf.mxu0
    %v698 = vadd.f32 %v678, %v697
    %699 = vdwg.mxu0
    %v700 = vmax.f32 %v698, 0.0
    %v701 = vld [vmem:[#allocation19] sm:$0xff]
    %v702 = vld [vmem:[#allocation19 + $0x8] sm:$0xff]
    %v703 = vld [vmem:[#allocation19 + $0x10] sm:$0xff]
    %v704 = vld [vmem:[#allocation19 + $0x18] sm:$0xff]
    %v705 = vld [vmem:[#allocation19 + $0x20] sm:$0xff]
    %v706 = vld [vmem:[#allocation19 + $0x28] sm:$0xff]
    %v707 = vld [vmem:[#allocation19 + $0x30] sm:$0xff]
    %v708 = vld [vmem:[#allocation19 + $0x38] sm:$0xff]
    %v709 = vld [vmem:[#allocation19 + $0x40] sm:$0xff]
    %v710 = vld [vmem:[#allocation19 + $0x48] sm:$0xff]
    %v711 = vld [vmem:[#allocation19 + $0x50] sm:$0xff]
    %v712 = vld [vmem:[#allocation19 + $0x58] sm:$0xff]
    %v713 = vld [vmem:[#allocation19 + $0x60] sm:$0xff]
    %v714 = vld [vmem:[#allocation19 + $0x68] sm:$0xff]
    %v715 = vld [vmem:[#allocation19 + $0x70] sm:$0xff]
    %v716 = vld [vmem:[#allocation19 + $0x78] sm:$0xff]
    %v717 = vld [vmem:[%s18] sm:$0x1]
    %v719 = vperm.slane %v717, 0
    %721 = vmatpush.msra.mxu0 %v716
    %722 = vmatpush.msra.mxu0 %v715
    %723 = vmatpush.msra.mxu0 %v714
    %724 = vmatpush.msra.mxu0 %v713
    %725 = vmatpush.msra.mxu0 %v712
    %726 = vmatpush.msra.mxu0 %v711
    %727 = vmatpush.msra.mxu0 %v710
    %728 = vmatpush.msra.mxu0 %v709
    %729 = vmatpush.msra.mxu0 %v708
    %730 = vmatpush.msra.mxu0 %v707
    %731 = vmatpush.msra.mxu0 %v706
    %732 = vmatpush.msra.mxu0 %v705
    %733 = vmatpush.msra.mxu0 %v704
    %734 = vmatpush.msra.mxu0 %v703
    %735 = vmatpush.msra.mxu0 %v702
    %736 = vmatpush.msra.mxu0 %v701
    %737 = vmatmul.f32.gmra.mxu0 %v700
    %v738 = vpop.f32.mrf.mxu0
    %v739 = vadd.f32 %v719, %v738
    %740 = vdwg.mxu0
    %741 = vst [vmem:[#allocation20] sm:$0xff] %v739
    // Predicated region
    $region118: #{tpu_custom_call.1} parent=1 // pred_check
      _
    $region119: #{tpu_custom_call.1} parent=1 // pred_check_branch
      %743 = sbr.rel (0) target = $region121
    $region120: #{tpu_custom_call.1} parent=1 // pred_region
      %745 = vsyncadd [#allocation5], 0
      %s747 = sshll.u32 [#allocation20], 4
      %s748 = int_to_ptr.vmem [resolvable:$true] %s747
      %s749 = sshll.u32 %s19, 4
      %s750 = int_to_ptr.hbm [resolvable:$true] %s749
      %752 = dma.vmem_to_hbm [thread:$0]  %s748, 128, %s750, [#allocation5]
    $region121: #{tpu_custom_call.1} parent=1 // pred_fallthru
      _
    // Predicated region
    $region122: #{tpu_custom_call.1} parent=1 // pred_check
      _
    $region123: #{tpu_custom_call.1} parent=1 // pred_check_branch
      %754 = sbr.rel (0) target = $region125
    $region124: #{tpu_custom_call.1} parent=1 // pred_region
      %756 = vsyncadd [#allocation22], 0
      %s758 = sshll.u32 [#allocation21], 4
      %s759 = int_to_ptr.vmem [resolvable:$true] %s758
      %s760 = sshll.u32 %s20, 4
      %s761 = int_to_ptr.hbm [resolvable:$true] %s760
      %763 = dma.vmem_to_hbm [thread:$0]  %s759, 128, %s761, [#allocation22]
    $region125: #{tpu_custom_call.1} parent=1 // pred_fallthru
      _
    // Predicated region
    $region126: #{tpu_custom_call.1} parent=1 // pred_check
      _
    $region127: #{tpu_custom_call.1} parent=1 // pred_check_branch
      %765 = sbr.rel (0) target = $region129
    $region128: #{tpu_custom_call.1} parent=1 // pred_region
      %767 = vsyncadd [#allocation22], 0
      %s769 = sshll.u32 [#allocation23], 4
      %s770 = int_to_ptr.vmem [resolvable:$true] %s769
      %s771 = sshll.u32 %s21, 4
      %s772 = int_to_ptr.hbm [resolvable:$true] %s771
      %774 = dma.vmem_to_hbm [thread:$0]  %s770, 128, %s772, [#allocation22]
    $region129: #{tpu_custom_call.1} parent=1 // pred_fallthru
      _
    // Predicated region
    $region130: #{tpu_custom_call.1} parent=1 // pred_check
      _
    $region131: #{tpu_custom_call.1} parent=1 // pred_check_branch
      %776 = sbr.rel (0) target = $region133
    $region132: #{tpu_custom_call.1} parent=1 // pred_region
      %778 = vsyncadd [#allocation25], 0
      %s780 = sshll.u32 [#allocation24], 4
      %s781 = int_to_ptr.vmem [resolvable:$true] %s780
      %s782 = sshll.u32 %s22, 4
      %s783 = int_to_ptr.hbm [resolvable:$true] %s782
      %785 = dma.vmem_to_hbm [thread:$0]  %s781, 128, %s783, [#allocation25]
    $region133: #{tpu_custom_call.1} parent=1 // pred_fallthru
      _
    // Predicated region
    $region134: #{tpu_custom_call.1} parent=1 // pred_check
      _
    $region135: #{tpu_custom_call.1} parent=1 // pred_check_branch
      %787 = sbr.rel (0) target = $region137
    $region136: #{tpu_custom_call.1} parent=1 // pred_region
      %789 = vsyncadd [#allocation25], 0
      %s791 = sshll.u32 [#allocation26], 4
      %s792 = int_to_ptr.vmem [resolvable:$true] %s791
      %s793 = sshll.u32 %s23, 4
      %s794 = int_to_ptr.hbm [resolvable:$true] %s793
      %796 = dma.vmem_to_hbm [thread:$0]  %s792, 128, %s794, [#allocation25]
    $region137: #{tpu_custom_call.1} parent=1 // pred_fallthru
      _
    // Predicated region
    $region138: #{tpu_custom_call.1} parent=1 // pred_check
      _
    $region139: #{tpu_custom_call.1} parent=1 // pred_check_branch
      %798 = sbr.rel (0) target = $region141
    $region140: #{tpu_custom_call.1} parent=1 // pred_region
      %800 = vsyncadd [#allocation28], 0
      %s802 = sshll.u32 [#allocation27], 4
      %s803 = int_to_ptr.vmem [resolvable:$true] %s802
      %s804 = sshll.u32 %s24, 4
      %s805 = int_to_ptr.hbm [resolvable:$true] %s804
      %807 = dma.vmem_to_hbm [thread:$0]  %s803, 128, %s805, [#allocation28]
    $region141: #{tpu_custom_call.1} parent=1 // pred_fallthru
      _
    // Predicated region
    $region142: #{tpu_custom_call.1} parent=1 // pred_check
      _
    $region143: #{tpu_custom_call.1} parent=1 // pred_check_branch
      %809 = sbr.rel (0) target = $region145
    $region144: #{tpu_custom_call.1} parent=1 // pred_region
      %811 = dma.done [#allocation5], 128
    $region145: #{tpu_custom_call.1} parent=1 // pred_fallthru
      _
    // Predicated region
    $region146: #{tpu_custom_call.1} parent=1 // pred_check
      _
    $region147: #{tpu_custom_call.1} parent=1 // pred_check_branch
      %813 = sbr.rel (0) target = $region149
    $region148: #{tpu_custom_call.1} parent=1 // pred_region
      %815 = dma.done [#allocation22], 128
    $region149: #{tpu_custom_call.1} parent=1 // pred_fallthru
      _
    // Predicated region
    $region150: #{tpu_custom_call.1} parent=1 // pred_check
      _
    $region151: #{tpu_custom_call.1} parent=1 // pred_check_branch
      %817 = sbr.rel (0) target = $region153
    $region152: #{tpu_custom_call.1} parent=1 // pred_region
      %819 = dma.done [#allocation22], 128
    $region153: #{tpu_custom_call.1} parent=1 // pred_fallthru
      _
    // Predicated region
    $region154: #{tpu_custom_call.1} parent=1 // pred_check
      _
    $region155: #{tpu_custom_call.1} parent=1 // pred_check_branch
      %821 = sbr.rel (0) target = $region157
    $region156: #{tpu_custom_call.1} parent=1 // pred_region
      %823 = dma.done [#allocation25], 128
    $region157: #{tpu_custom_call.1} parent=1 // pred_fallthru
      _
    // Predicated region
    $region158: #{tpu_custom_call.1} parent=1 // pred_check
      _
    $region159: #{tpu_custom_call.1} parent=1 // pred_check_branch
      %825 = sbr.rel (0) target = $region161
    $region160: #{tpu_custom_call.1} parent=1 // pred_region
      %827 = dma.done [#allocation25], 128
    $region161: #{tpu_custom_call.1} parent=1 // pred_fallthru
      _
    // Predicated region
    $region162: #{tpu_custom_call.1} parent=1 // pred_check
      _
    $region163: #{tpu_custom_call.1} parent=1 // pred_check_branch
      %829 = sbr.rel (0) target = $region165
    $region164: #{tpu_custom_call.1} parent=1 // pred_region
      %831 = dma.done [#allocation28], 128
    $region165: #{tpu_custom_call.1} parent=1 // pred_fallthru
      _
    %832 = vsyncpa [#allocation4], 1
    %833 = vsyncpa [#allocation9], 1
    %834 = vsyncpa [#allocation12], 1
    %835 = vsyncpa [#allocation15], 1
    %836 = vsyncpa [#allocation18], 1
    %837 = vsyncpa [#allocation5], 1
    %838 = vsyncpa [#allocation22], 1
    %839 = vsyncpa [#allocation25], 1
    %840 = vsyncpa [#allocation28], 1
    %841 = vsyncpa [#allocation6], 1

</llo_original>
